<compile_context>
chip_gen: v7x
topology: tpu7x:2x2x1
jax: 0.10.0
libtpu: 0.0.40
codegen_flags: <defaults>
</compile_context>

<pallas_src>
import functools

import jax
import jax.numpy as jnp
from jax.experimental import pallas as pl
from jax.experimental.pallas import tpu as pltpu

LN_EPS = 1e-5  # PyTorch LayerNorm default


def _round_up(x, m):
    return (x + m - 1) // m * m


def _q_critic_kernel(state_ref, action_ref,
                     w1_ref, b1_ref, g1_ref, be1_ref,
                     w2x_ref, w2a_ref, b2_ref, g2_ref, be2_ref,
                     w3_ref, b3_ref, g3_ref, be3_ref,
                     w4_ref, b4_ref,
                     q_ref, *, matmul_dtype):
    def mm(x, w_ref):
        # Weights are already stored in matmul_dtype (pre-cast once in the
        # wrapper); only the activation is cast here.  f32 MXU accumulation.
        return jnp.dot(x.astype(matmul_dtype), w_ref[...],
                       preferred_element_type=jnp.float32)

    def ln_relu(h, gamma, beta):
        # One-pass LayerNorm statistics: two INDEPENDENT cross-lane reductions
        # (sum, sum of squares) so the XLU passes can overlap; rsqrt goes to
        # the EUP.  All in f32.
        inv_n = 1.0 / h.shape[-1]
        s1 = jnp.sum(h, axis=-1, keepdims=True)
        s2 = jnp.sum(h * h, axis=-1, keepdims=True)
        mu = s1 * inv_n
        var = jnp.maximum(s2 * inv_n - mu * mu, 0.0)
        normed = (h - mu) * jax.lax.rsqrt(var + LN_EPS)
        return jnp.maximum(normed * gamma + beta, 0.0)

    state = state_ref[...]        # (TB, S) f32
    action = action_ref[...]      # (TB, A) f32

    # x = relu(ln1(l1(state)))
    h1 = mm(state, w1_ref) + b1_ref[...]
    x1 = ln_relu(h1, g1_ref[...], be1_ref[...])

    # x = relu(ln2(l2(cat([x, action]))))
    # torch.cat folded into split weights w2x / w2a.  The action half would pad
    # K=action_dim to a full MXU pass, so it is done as `A` broadcast FMAs on
    # the VPU (f32) instead, hidden under the dominant K=net_width matmul.
    h2 = mm(x1, w2x_ref) + b2_ref[...]
    w2a = w2a_ref[...]            # (A, H2) f32, tiny
    for a in range(action.shape[1]):   # static unroll; A is small for RL critics
        h2 = h2 + action[:, a:a + 1] * w2a[a:a + 1, :]
    x2 = ln_relu(h2, g2_ref[...], be2_ref[...])

    # x = relu(ln3(l3(x)))
    h3 = mm(x2, w3_ref) + b3_ref[...]
    x3 = ln_relu(h3, g3_ref[...], be3_ref[...])

    # q = l4(x): out_features == 1 -> VPU multiply + row reduce in f32 instead
    # of a 1-column MXU matmul.  (w4 stored as (1, H4).)
    q_ref[...] = jnp.sum(x3 * w4_ref[...], axis=-1, keepdims=True) + b4_ref[...]


def prepare_params(params, matmul_dtype=jnp.bfloat16):
    """Cast the large MXU weight matrices once (bf16 by default): halves weight
    HBM DMA / resident VMEM and removes per-grid-step casts.  Everything else
    (biases, LayerNorm affine, tiny action & output weights) stays f32."""
    p = dict(params)
    for k in ("w1", "w2x", "w3"):
        p[k] = p[k].astype(matmul_dtype)
    return p


def q_critic_forward(state, action, params, *, block_b=512):
    """state: (B, S) f32, action: (B, A) f32 -> (B, 1) f32.

    The matmul dtype follows params['w1'].dtype (use `prepare_params` for the
    recommended bf16-weight / f32-accumulation path)."""
    B, S = state.shape
    A = action.shape[1]
    matmul_dtype = params["w1"].dtype

    # Batch tile.  Aim for >= 2 grid steps so ("parallel",) can shard the batch
    # axis across both TensorCores on v7x; tb is a sublane (8) multiple so a
    # partial last block stays layout-legal for any B.
    if B <= 16:
        tb = B                                            # single full block
    else:
        tb = min(block_b, _round_up(pl.cdiv(B, 2), 8))
    grid = (pl.cdiv(B, tb),)

    def act_spec(d):
        return pl.BlockSpec((tb, d), lambda i: (i, 0))

    def param_spec(shape):
        # Same block index every grid step => parameter stays resident in VMEM.
        return pl.BlockSpec(shape, lambda i: (0, 0))

    weight_args = (
        params["w1"], params["b1"], params["g1"], params["be1"],
        params["w2x"], params["w2a"], params["b2"], params["g2"], params["be2"],
        params["w3"], params["b3"], params["g3"], params["be3"],
        params["w4"], params["b4"],
    )
    in_specs = [act_spec(S), act_spec(A)] + [param_spec(w.shape) for w in weight_args]

    kernel = functools.partial(_q_critic_kernel, matmul_dtype=matmul_dtype)
    return pl.pallas_call(
        kernel,
        out_shape=jax.ShapeDtypeStruct((B, 1), jnp.float32),
        grid=grid,
        in_specs=in_specs,
        out_specs=act_spec(1),
        compiler_params=pltpu.CompilerParams(
            dimension_semantics=("parallel",),     # megacore sharding on v7x
            vmem_limit_bytes=48 * 1024 * 1024,     # room for TB=512 f32 activations
        ),
    )(state, action, *weight_args)


def init_params(key, state_dim, action_dim, net_width):
    """Deterministic init mimicking PyTorch's U(-1/sqrt(fan_in), 1/sqrt(fan_in))."""
    H, H2, H4 = net_width, net_width // 2, net_width // 4

    def linear(key, fan_in, fan_out):
        kw, kb = jax.random.split(key)
        bound = 1.0 / jnp.sqrt(fan_in)
        w = jax.random.uniform(kw, (fan_in, fan_out), jnp.float32, -bound, bound)
        b = jax.random.uniform(kb, (1, fan_out), jnp.float32, -bound, bound)
        return w, b

    k1, k2, k3, k4 = jax.random.split(key, 4)
    w1, b1 = linear(k1, state_dim, H)
    w2, b2 = linear(k2, H + action_dim, H2)   # full l2 weight, then split
    w3, b3 = linear(k3, H2, H4)
    w4, b4 = linear(k4, H4, 1)

    return {
        "w1": w1, "b1": b1,
        "g1": jnp.ones((1, H), jnp.float32), "be1": jnp.zeros((1, H), jnp.float32),
        "w2x": w2[:H, :], "w2a": w2[H:, :], "b2": b2,
        "g2": jnp.ones((1, H2), jnp.float32), "be2": jnp.zeros((1, H2), jnp.float32),
        "w3": w3, "b3": b3,
        "g3": jnp.ones((1, H4), jnp.float32), "be3": jnp.zeros((1, H4), jnp.float32),
        "w4": w4.T,            # stored (1, H4) for the VPU mul+reduce final layer
        "b4": b4,              # (1, 1)
    }


def q_critic_reference(state, action, p):
    """Pure-JAX mirror of the PyTorch forward, matching the kernel's numerics:
    the large matmuls use p['w*'].dtype inputs with f32 accumulation, the
    action term and the final (out=1) layer stay f32."""
    mmdt = p["w1"].dtype

    def mm(x, w):
        return jnp.dot(x.astype(mmdt), w, preferred_element_type=jnp.float32)

    def ln(h, g, b):
        mu = jnp.mean(h, axis=-1, keepdims=True)
        var = jnp.mean((h - mu) ** 2, axis=-1, keepdims=True)
        return (h - mu) / jnp.sqrt(var + LN_EPS) * g + b

    x = jax.nn.relu(ln(mm(state, p["w1"]) + p["b1"], p["g1"], p["be1"]))
    h2 = (mm(x, p["w2x"])
          + jnp.dot(action, p["w2a"], preferred_element_type=jnp.float32)
          + p["b2"])
    x = jax.nn.relu(ln(h2, p["g2"], p["be2"]))
    x = jax.nn.relu(ln(mm(x, p["w3"]) + p["b3"], p["g3"], p["be3"]))
    return jnp.sum(x * p["w4"], axis=-1, keepdims=True) + p["b4"]


if __name__ == "__main__":
    # Small demo shapes consistent with the module (net_width divisible by 4).
    B, STATE_DIM, ACTION_DIM, NET_WIDTH = 32, 16, 8, 128

    key = jax.random.PRNGKey(0)
    kp, ks, ka = jax.random.split(key, 3)
    params_f32 = init_params(kp, STATE_DIM, ACTION_DIM, NET_WIDTH)
    state = jax.random.normal(ks, (B, STATE_DIM), jnp.float32)
    action = jax.random.normal(ka, (B, ACTION_DIM), jnp.float32)

    # 1) Default path: bf16 weights / matmul inputs, f32 accumulation + LN.
    #    B=32 -> tb=16, grid=2 (both TensorCores busy on v7x).
    params_bf16 = prepare_params(params_f32)             # bf16 is the default
    q = jax.block_until_ready(q_critic_forward(state, action, params_bf16))
    q_ref = q_critic_reference(state, action, params_bf16)
    assert q.shape == (B, 1)
    assert jnp.allclose(q, q_ref, atol=2e-3, rtol=2e-3), "bf16 mismatch vs reference"

    # 2) Pure-f32 path, multi-step grid with a partial last block
    #    (B=50, block_b=16 -> grid=4, resident weights across steps).
    B2 = 50
    ks2, ka2 = jax.random.split(jax.random.PRNGKey(1))
    state2 = jax.random.normal(ks2, (B2, STATE_DIM), jnp.float32)
    action2 = jax.random.normal(ka2, (B2, ACTION_DIM), jnp.float32)
    q2 = jax.block_until_ready(
        q_critic_forward(state2, action2, params_f32, block_b=16))
    q2_ref = q_critic_reference(state2, action2, params_f32)
    assert q2.shape == (B2, 1)
    assert jnp.allclose(q2, q2_ref, atol=5e-4, rtol=5e-4), "f32/grid mismatch vs reference"

    print("KERNEL_OK")
</pallas_src>

<mosaic_0001>
module attributes {stable_mosaic.version = 11 : i64} {
  func.func @_q_critic_kernel(%arg0: i32, %arg1: memref<16x16xf32, #tpu.memory_space<vmem>>, %arg2: memref<16x8xf32, #tpu.memory_space<vmem>>, %arg3: memref<16x128xbf16, #tpu.memory_space<vmem>>, %arg4: memref<1x128xf32, #tpu.memory_space<vmem>>, %arg5: memref<1x128xf32, #tpu.memory_space<vmem>>, %arg6: memref<1x128xf32, #tpu.memory_space<vmem>>, %arg7: memref<128x64xbf16, #tpu.memory_space<vmem>>, %arg8: memref<8x64xf32, #tpu.memory_space<vmem>>, %arg9: memref<1x64xf32, #tpu.memory_space<vmem>>, %arg10: memref<1x64xf32, #tpu.memory_space<vmem>>, %arg11: memref<1x64xf32, #tpu.memory_space<vmem>>, %arg12: memref<64x32xbf16, #tpu.memory_space<vmem>>, %arg13: memref<1x32xf32, #tpu.memory_space<vmem>>, %arg14: memref<1x32xf32, #tpu.memory_space<vmem>>, %arg15: memref<1x32xf32, #tpu.memory_space<vmem>>, %arg16: memref<1x32xf32, #tpu.memory_space<vmem>>, %arg17: memref<1x1xf32, #tpu.memory_space<vmem>>, %arg18: memref<16x1xf32, #tpu.memory_space<vmem>>) attributes {dimension_semantics = [#tpu.dimension_semantics<parallel>], iteration_bounds = array<i64: 2>, scalar_prefetch = 0 : i64, scratch_operands = 0 : i64, tpu.core_type = #tpu.core_type<tc>, window_params = [{transform_indices = @transform_0, window_bounds = array<i64: 16, 16>}, {transform_indices = @transform_1, window_bounds = array<i64: 16, 8>}, {pipeline_mode = #tpu.pipeline_mode<synchronous>, transform_indices = @transform_2, window_bounds = array<i64: 16, 128>}, {pipeline_mode = #tpu.pipeline_mode<synchronous>, transform_indices = @transform_3, window_bounds = array<i64: 1, 128>}, {pipeline_mode = #tpu.pipeline_mode<synchronous>, transform_indices = @transform_4, window_bounds = array<i64: 1, 128>}, {pipeline_mode = #tpu.pipeline_mode<synchronous>, transform_indices = @transform_5, window_bounds = array<i64: 1, 128>}, {pipeline_mode = #tpu.pipeline_mode<synchronous>, transform_indices = @transform_6, window_bounds = array<i64: 128, 64>}, {pipeline_mode = #tpu.pipeline_mode<synchronous>, transform_indices = @transform_7, window_bounds = array<i64: 8, 64>}, {pipeline_mode = #tpu.pipeline_mode<synchronous>, transform_indices = @transform_8, window_bounds = array<i64: 1, 64>}, {pipeline_mode = #tpu.pipeline_mode<synchronous>, transform_indices = @transform_9, window_bounds = array<i64: 1, 64>}, {pipeline_mode = #tpu.pipeline_mode<synchronous>, transform_indices = @transform_10, window_bounds = array<i64: 1, 64>}, {pipeline_mode = #tpu.pipeline_mode<synchronous>, transform_indices = @transform_11, window_bounds = array<i64: 64, 32>}, {pipeline_mode = #tpu.pipeline_mode<synchronous>, transform_indices = @transform_12, window_bounds = array<i64: 1, 32>}, {pipeline_mode = #tpu.pipeline_mode<synchronous>, transform_indices = @transform_13, window_bounds = array<i64: 1, 32>}, {pipeline_mode = #tpu.pipeline_mode<synchronous>, transform_indices = @transform_14, window_bounds = array<i64: 1, 32>}, {pipeline_mode = #tpu.pipeline_mode<synchronous>, transform_indices = @transform_15, window_bounds = array<i64: 1, 32>}, {pipeline_mode = #tpu.pipeline_mode<synchronous>, transform_indices = @transform_16, window_bounds = array<i64: 1, 1>}, {transform_indices = @transform_17, window_bounds = array<i64: 16, 1>}]} {
    %c0 = arith.constant 0 : index
    %c0_0 = arith.constant 0 : index
    %0 = vector.load %arg1[%c0, %c0_0] : memref<16x16xf32, #tpu.memory_space<vmem>>, vector<16x16xf32>
    %c0_1 = arith.constant 0 : index
    %c0_2 = arith.constant 0 : index
    %1 = vector.load %arg2[%c0_1, %c0_2] : memref<16x8xf32, #tpu.memory_space<vmem>>, vector<16x8xf32>
    %2 = arith.truncf %0 : vector<16x16xf32> to vector<16x16xbf16>
    %c0_3 = arith.constant 0 : index
    %c0_4 = arith.constant 0 : index
    %3 = vector.load %arg3[%c0_3, %c0_4] : memref<16x128xbf16, #tpu.memory_space<vmem>>, vector<16x128xbf16>
    %cst = arith.constant dense<0.000000e+00> : vector<16x128xf32>
    %4 = tpu.matmul %2, %3, %cst {dimension_numbers = #tpu.dot_dimension_numbers<[1], [0], [0], [1], [0, 0, 1, 1], [], []>} : vector<16x16xbf16>, vector<16x128xbf16>, vector<16x128xf32> -> vector<16x128xf32>
    %c0_5 = arith.constant 0 : index
    %c0_6 = arith.constant 0 : index
    %5 = vector.load %arg4[%c0_5, %c0_6] : memref<1x128xf32, #tpu.memory_space<vmem>>, vector<1x128xf32>
    %6 = vector.broadcast %5 : vector<1x128xf32> to vector<16x128xf32>
    %7 = arith.addf %4, %6 : vector<16x128xf32>
    %c0_7 = arith.constant 0 : index
    %c0_8 = arith.constant 0 : index
    %8 = vector.load %arg5[%c0_7, %c0_8] : memref<1x128xf32, #tpu.memory_space<vmem>>, vector<1x128xf32>
    %c0_9 = arith.constant 0 : index
    %c0_10 = arith.constant 0 : index
    %9 = vector.load %arg6[%c0_9, %c0_10] : memref<1x128xf32, #tpu.memory_space<vmem>>, vector<1x128xf32>
    %cst_11 = arith.constant dense<0.000000e+00> : vector<16xf32>
    %10 = vector.multi_reduction <add>, %7, %cst_11 [1] : vector<16x128xf32> to vector<16xf32>
    %11 = vector.shape_cast %10 : vector<16xf32> to vector<16x1xf32>
    %12 = arith.mulf %7, %7 : vector<16x128xf32>
    %cst_12 = arith.constant dense<0.000000e+00> : vector<16xf32>
    %13 = vector.multi_reduction <add>, %12, %cst_12 [1] : vector<16x128xf32> to vector<16xf32>
    %14 = vector.shape_cast %13 : vector<16xf32> to vector<16x1xf32>
    %cst_13 = arith.constant 7.812500e-03 : f32
    %15 = vector.broadcast %cst_13 : f32 to vector<16x1xf32>
    %16 = arith.mulf %11, %15 : vector<16x1xf32>
    %cst_14 = arith.constant 7.812500e-03 : f32
    %17 = vector.broadcast %cst_14 : f32 to vector<16x1xf32>
    %18 = arith.mulf %14, %17 : vector<16x1xf32>
    %19 = arith.mulf %16, %16 : vector<16x1xf32>
    %20 = arith.subf %18, %19 : vector<16x1xf32>
    %cst_15 = arith.constant 0.000000e+00 : f32
    %21 = vector.broadcast %cst_15 : f32 to vector<16x1xf32>
    %22 = arith.maximumf %20, %21 : vector<16x1xf32>
    %23 = vector.broadcast %16 : vector<16x1xf32> to vector<16x128xf32>
    %24 = arith.subf %7, %23 : vector<16x128xf32>
    %cst_16 = arith.constant 9.99999974E-6 : f32
    %25 = vector.broadcast %cst_16 : f32 to vector<16x1xf32>
    %26 = arith.addf %22, %25 : vector<16x1xf32>
    %27 = math.rsqrt %26 : vector<16x1xf32>
    %28 = vector.broadcast %27 : vector<16x1xf32> to vector<16x128xf32>
    %29 = arith.mulf %24, %28 : vector<16x128xf32>
    %30 = vector.broadcast %8 : vector<1x128xf32> to vector<16x128xf32>
    %31 = arith.mulf %29, %30 : vector<16x128xf32>
    %32 = vector.broadcast %9 : vector<1x128xf32> to vector<16x128xf32>
    %33 = arith.addf %31, %32 : vector<16x128xf32>
    %cst_17 = arith.constant 0.000000e+00 : f32
    %34 = vector.broadcast %cst_17 : f32 to vector<16x128xf32>
    %35 = arith.maximumf %33, %34 : vector<16x128xf32>
    %36 = arith.truncf %35 : vector<16x128xf32> to vector<16x128xbf16>
    %c0_18 = arith.constant 0 : index
    %c0_19 = arith.constant 0 : index
    %37 = vector.load %arg7[%c0_18, %c0_19] : memref<128x64xbf16, #tpu.memory_space<vmem>>, vector<128x64xbf16>
    %cst_20 = arith.constant dense<0.000000e+00> : vector<16x64xf32>
    %38 = tpu.matmul %36, %37, %cst_20 {dimension_numbers = #tpu.dot_dimension_numbers<[1], [0], [0], [1], [0, 0, 1, 1], [], []>} : vector<16x128xbf16>, vector<128x64xbf16>, vector<16x64xf32> -> vector<16x64xf32>
    %c0_21 = arith.constant 0 : index
    %c0_22 = arith.constant 0 : index
    %39 = vector.load %arg9[%c0_21, %c0_22] : memref<1x64xf32, #tpu.memory_space<vmem>>, vector<1x64xf32>
    %40 = vector.broadcast %39 : vector<1x64xf32> to vector<16x64xf32>
    %41 = arith.addf %38, %40 : vector<16x64xf32>
    %c0_23 = arith.constant 0 : index
    %c0_24 = arith.constant 0 : index
    %42 = vector.load %arg8[%c0_23, %c0_24] : memref<8x64xf32, #tpu.memory_space<vmem>>, vector<8x64xf32>
    %43 = vector.extract_strided_slice %1 {offsets = [0, 0], sizes = [16, 1], strides = [1, 1]} : vector<16x8xf32> to vector<16x1xf32>
    %44 = vector.extract_strided_slice %42 {offsets = [0, 0], sizes = [1, 64], strides = [1, 1]} : vector<8x64xf32> to vector<1x64xf32>
    %45 = vector.broadcast %43 : vector<16x1xf32> to vector<16x64xf32>
    %46 = vector.broadcast %44 : vector<1x64xf32> to vector<16x64xf32>
    %47 = arith.mulf %45, %46 : vector<16x64xf32>
    %48 = arith.addf %41, %47 : vector<16x64xf32>
    %49 = vector.extract_strided_slice %1 {offsets = [0, 1], sizes = [16, 1], strides = [1, 1]} : vector<16x8xf32> to vector<16x1xf32>
    %50 = vector.extract_strided_slice %42 {offsets = [1, 0], sizes = [1, 64], strides = [1, 1]} : vector<8x64xf32> to vector<1x64xf32>
    %51 = vector.broadcast %49 : vector<16x1xf32> to vector<16x64xf32>
    %52 = vector.broadcast %50 : vector<1x64xf32> to vector<16x64xf32>
    %53 = arith.mulf %51, %52 : vector<16x64xf32>
    %54 = arith.addf %48, %53 : vector<16x64xf32>
    %55 = vector.extract_strided_slice %1 {offsets = [0, 2], sizes = [16, 1], strides = [1, 1]} : vector<16x8xf32> to vector<16x1xf32>
    %56 = vector.extract_strided_slice %42 {offsets = [2, 0], sizes = [1, 64], strides = [1, 1]} : vector<8x64xf32> to vector<1x64xf32>
    %57 = vector.broadcast %55 : vector<16x1xf32> to vector<16x64xf32>
    %58 = vector.broadcast %56 : vector<1x64xf32> to vector<16x64xf32>
    %59 = arith.mulf %57, %58 : vector<16x64xf32>
    %60 = arith.addf %54, %59 : vector<16x64xf32>
    %61 = vector.extract_strided_slice %1 {offsets = [0, 3], sizes = [16, 1], strides = [1, 1]} : vector<16x8xf32> to vector<16x1xf32>
    %62 = vector.extract_strided_slice %42 {offsets = [3, 0], sizes = [1, 64], strides = [1, 1]} : vector<8x64xf32> to vector<1x64xf32>
    %63 = vector.broadcast %61 : vector<16x1xf32> to vector<16x64xf32>
    %64 = vector.broadcast %62 : vector<1x64xf32> to vector<16x64xf32>
    %65 = arith.mulf %63, %64 : vector<16x64xf32>
    %66 = arith.addf %60, %65 : vector<16x64xf32>
    %67 = vector.extract_strided_slice %1 {offsets = [0, 4], sizes = [16, 1], strides = [1, 1]} : vector<16x8xf32> to vector<16x1xf32>
    %68 = vector.extract_strided_slice %42 {offsets = [4, 0], sizes = [1, 64], strides = [1, 1]} : vector<8x64xf32> to vector<1x64xf32>
    %69 = vector.broadcast %67 : vector<16x1xf32> to vector<16x64xf32>
    %70 = vector.broadcast %68 : vector<1x64xf32> to vector<16x64xf32>
    %71 = arith.mulf %69, %70 : vector<16x64xf32>
    %72 = arith.addf %66, %71 : vector<16x64xf32>
    %73 = vector.extract_strided_slice %1 {offsets = [0, 5], sizes = [16, 1], strides = [1, 1]} : vector<16x8xf32> to vector<16x1xf32>
    %74 = vector.extract_strided_slice %42 {offsets = [5, 0], sizes = [1, 64], strides = [1, 1]} : vector<8x64xf32> to vector<1x64xf32>
    %75 = vector.broadcast %73 : vector<16x1xf32> to vector<16x64xf32>
    %76 = vector.broadcast %74 : vector<1x64xf32> to vector<16x64xf32>
    %77 = arith.mulf %75, %76 : vector<16x64xf32>
    %78 = arith.addf %72, %77 : vector<16x64xf32>
    %79 = vector.extract_strided_slice %1 {offsets = [0, 6], sizes = [16, 1], strides = [1, 1]} : vector<16x8xf32> to vector<16x1xf32>
    %80 = vector.extract_strided_slice %42 {offsets = [6, 0], sizes = [1, 64], strides = [1, 1]} : vector<8x64xf32> to vector<1x64xf32>
    %81 = vector.broadcast %79 : vector<16x1xf32> to vector<16x64xf32>
    %82 = vector.broadcast %80 : vector<1x64xf32> to vector<16x64xf32>
    %83 = arith.mulf %81, %82 : vector<16x64xf32>
    %84 = arith.addf %78, %83 : vector<16x64xf32>
    %85 = vector.extract_strided_slice %1 {offsets = [0, 7], sizes = [16, 1], strides = [1, 1]} : vector<16x8xf32> to vector<16x1xf32>
    %86 = vector.extract_strided_slice %42 {offsets = [7, 0], sizes = [1, 64], strides = [1, 1]} : vector<8x64xf32> to vector<1x64xf32>
    %87 = vector.broadcast %85 : vector<16x1xf32> to vector<16x64xf32>
    %88 = vector.broadcast %86 : vector<1x64xf32> to vector<16x64xf32>
    %89 = arith.mulf %87, %88 : vector<16x64xf32>
    %90 = arith.addf %84, %89 : vector<16x64xf32>
    %c0_25 = arith.constant 0 : index
    %c0_26 = arith.constant 0 : index
    %91 = vector.load %arg10[%c0_25, %c0_26] : memref<1x64xf32, #tpu.memory_space<vmem>>, vector<1x64xf32>
    %c0_27 = arith.constant 0 : index
    %c0_28 = arith.constant 0 : index
    %92 = vector.load %arg11[%c0_27, %c0_28] : memref<1x64xf32, #tpu.memory_space<vmem>>, vector<1x64xf32>
    %cst_29 = arith.constant dense<0.000000e+00> : vector<16xf32>
    %93 = vector.multi_reduction <add>, %90, %cst_29 [1] : vector<16x64xf32> to vector<16xf32>
    %94 = vector.shape_cast %93 : vector<16xf32> to vector<16x1xf32>
    %95 = arith.mulf %90, %90 : vector<16x64xf32>
    %cst_30 = arith.constant dense<0.000000e+00> : vector<16xf32>
    %96 = vector.multi_reduction <add>, %95, %cst_30 [1] : vector<16x64xf32> to vector<16xf32>
    %97 = vector.shape_cast %96 : vector<16xf32> to vector<16x1xf32>
    %cst_31 = arith.constant 1.562500e-02 : f32
    %98 = vector.broadcast %cst_31 : f32 to vector<16x1xf32>
    %99 = arith.mulf %94, %98 : vector<16x1xf32>
    %cst_32 = arith.constant 1.562500e-02 : f32
    %100 = vector.broadcast %cst_32 : f32 to vector<16x1xf32>
    %101 = arith.mulf %97, %100 : vector<16x1xf32>
    %102 = arith.mulf %99, %99 : vector<16x1xf32>
    %103 = arith.subf %101, %102 : vector<16x1xf32>
    %cst_33 = arith.constant 0.000000e+00 : f32
    %104 = vector.broadcast %cst_33 : f32 to vector<16x1xf32>
    %105 = arith.maximumf %103, %104 : vector<16x1xf32>
    %106 = vector.broadcast %99 : vector<16x1xf32> to vector<16x64xf32>
    %107 = arith.subf %90, %106 : vector<16x64xf32>
    %cst_34 = arith.constant 9.99999974E-6 : f32
    %108 = vector.broadcast %cst_34 : f32 to vector<16x1xf32>
    %109 = arith.addf %105, %108 : vector<16x1xf32>
    %110 = math.rsqrt %109 : vector<16x1xf32>
    %111 = vector.broadcast %110 : vector<16x1xf32> to vector<16x64xf32>
    %112 = arith.mulf %107, %111 : vector<16x64xf32>
    %113 = vector.broadcast %91 : vector<1x64xf32> to vector<16x64xf32>
    %114 = arith.mulf %112, %113 : vector<16x64xf32>
    %115 = vector.broadcast %92 : vector<1x64xf32> to vector<16x64xf32>
    %116 = arith.addf %114, %115 : vector<16x64xf32>
    %cst_35 = arith.constant 0.000000e+00 : f32
    %117 = vector.broadcast %cst_35 : f32 to vector<16x64xf32>
    %118 = arith.maximumf %116, %117 : vector<16x64xf32>
    %119 = arith.truncf %118 : vector<16x64xf32> to vector<16x64xbf16>
    %c0_36 = arith.constant 0 : index
    %c0_37 = arith.constant 0 : index
    %120 = vector.load %arg12[%c0_36, %c0_37] : memref<64x32xbf16, #tpu.memory_space<vmem>>, vector<64x32xbf16>
    %cst_38 = arith.constant dense<0.000000e+00> : vector<16x32xf32>
    %121 = tpu.matmul %119, %120, %cst_38 {dimension_numbers = #tpu.dot_dimension_numbers<[1], [0], [0], [1], [0, 0, 1, 1], [], []>} : vector<16x64xbf16>, vector<64x32xbf16>, vector<16x32xf32> -> vector<16x32xf32>
    %c0_39 = arith.constant 0 : index
    %c0_40 = arith.constant 0 : index
    %122 = vector.load %arg13[%c0_39, %c0_40] : memref<1x32xf32, #tpu.memory_space<vmem>>, vector<1x32xf32>
    %123 = vector.broadcast %122 : vector<1x32xf32> to vector<16x32xf32>
    %124 = arith.addf %121, %123 : vector<16x32xf32>
    %c0_41 = arith.constant 0 : index
    %c0_42 = arith.constant 0 : index
    %125 = vector.load %arg14[%c0_41, %c0_42] : memref<1x32xf32, #tpu.memory_space<vmem>>, vector<1x32xf32>
    %c0_43 = arith.constant 0 : index
    %c0_44 = arith.constant 0 : index
    %126 = vector.load %arg15[%c0_43, %c0_44] : memref<1x32xf32, #tpu.memory_space<vmem>>, vector<1x32xf32>
    %cst_45 = arith.constant dense<0.000000e+00> : vector<16xf32>
    %127 = vector.multi_reduction <add>, %124, %cst_45 [1] : vector<16x32xf32> to vector<16xf32>
    %128 = vector.shape_cast %127 : vector<16xf32> to vector<16x1xf32>
    %129 = arith.mulf %124, %124 : vector<16x32xf32>
    %cst_46 = arith.constant dense<0.000000e+00> : vector<16xf32>
    %130 = vector.multi_reduction <add>, %129, %cst_46 [1] : vector<16x32xf32> to vector<16xf32>
    %131 = vector.shape_cast %130 : vector<16xf32> to vector<16x1xf32>
    %cst_47 = arith.constant 3.125000e-02 : f32
    %132 = vector.broadcast %cst_47 : f32 to vector<16x1xf32>
    %133 = arith.mulf %128, %132 : vector<16x1xf32>
    %cst_48 = arith.constant 3.125000e-02 : f32
    %134 = vector.broadcast %cst_48 : f32 to vector<16x1xf32>
    %135 = arith.mulf %131, %134 : vector<16x1xf32>
    %136 = arith.mulf %133, %133 : vector<16x1xf32>
    %137 = arith.subf %135, %136 : vector<16x1xf32>
    %cst_49 = arith.constant 0.000000e+00 : f32
    %138 = vector.broadcast %cst_49 : f32 to vector<16x1xf32>
    %139 = arith.maximumf %137, %138 : vector<16x1xf32>
    %140 = vector.broadcast %133 : vector<16x1xf32> to vector<16x32xf32>
    %141 = arith.subf %124, %140 : vector<16x32xf32>
    %cst_50 = arith.constant 9.99999974E-6 : f32
    %142 = vector.broadcast %cst_50 : f32 to vector<16x1xf32>
    %143 = arith.addf %139, %142 : vector<16x1xf32>
    %144 = math.rsqrt %143 : vector<16x1xf32>
    %145 = vector.broadcast %144 : vector<16x1xf32> to vector<16x32xf32>
    %146 = arith.mulf %141, %145 : vector<16x32xf32>
    %147 = vector.broadcast %125 : vector<1x32xf32> to vector<16x32xf32>
    %148 = arith.mulf %146, %147 : vector<16x32xf32>
    %149 = vector.broadcast %126 : vector<1x32xf32> to vector<16x32xf32>
    %150 = arith.addf %148, %149 : vector<16x32xf32>
    %cst_51 = arith.constant 0.000000e+00 : f32
    %151 = vector.broadcast %cst_51 : f32 to vector<16x32xf32>
    %152 = arith.maximumf %150, %151 : vector<16x32xf32>
    %c0_52 = arith.constant 0 : index
    %c0_53 = arith.constant 0 : index
    %153 = vector.load %arg16[%c0_52, %c0_53] : memref<1x32xf32, #tpu.memory_space<vmem>>, vector<1x32xf32>
    %154 = vector.broadcast %153 : vector<1x32xf32> to vector<16x32xf32>
    %155 = arith.mulf %152, %154 : vector<16x32xf32>
    %cst_54 = arith.constant dense<0.000000e+00> : vector<16xf32>
    %156 = vector.multi_reduction <add>, %155, %cst_54 [1] : vector<16x32xf32> to vector<16xf32>
    %157 = vector.shape_cast %156 : vector<16xf32> to vector<16x1xf32>
    %c0_55 = arith.constant 0 : index
    %c0_56 = arith.constant 0 : index
    %158 = vector.load %arg17[%c0_55, %c0_56] : memref<1x1xf32, #tpu.memory_space<vmem>>, vector<1x1xf32>
    %159 = vector.broadcast %158 : vector<1x1xf32> to vector<16x1xf32>
    %160 = arith.addf %157, %159 : vector<16x1xf32>
    %c0_57 = arith.constant 0 : index
    %c0_58 = arith.constant 0 : index
    %161 = vector.load %arg18[%c0_57, %c0_58] : memref<16x1xf32, #tpu.memory_space<vmem>>, vector<16x1xf32>
    tpu.vector_store %arg18[%c0_57, %c0_58], %160 {strides = array<i32>} : memref<16x1xf32, #tpu.memory_space<vmem>>, vector<16x1xf32>,
    return
  }
  func.func @transform_0(%arg0: i32) -> (i32, i32) {
    %c0_i32 = arith.constant 0 : i32
    %c0_i32_0 = arith.constant 0 : i32
    return %arg0, %c0_i32 : i32, i32
  }
  func.func @transform_1(%arg0: i32) -> (i32, i32) {
    %c0_i32 = arith.constant 0 : i32
    %c0_i32_0 = arith.constant 0 : i32
    return %arg0, %c0_i32 : i32, i32
  }
  func.func @transform_2(%arg0: i32) -> (i32, i32) {
    %c0_i32 = arith.constant 0 : i32
    %c0_i32_0 = arith.constant 0 : i32
    %c0_i32_1 = arith.constant 0 : i32
    return %c0_i32, %c0_i32_0 : i32, i32
  }
  func.func @transform_3(%arg0: i32) -> (i32, i32) {
    %c0_i32 = arith.constant 0 : i32
    %c0_i32_0 = arith.constant 0 : i32
    %c0_i32_1 = arith.constant 0 : i32
    return %c0_i32, %c0_i32_0 : i32, i32
  }
  func.func @transform_4(%arg0: i32) -> (i32, i32) {
    %c0_i32 = arith.constant 0 : i32
    %c0_i32_0 = arith.constant 0 : i32
    %c0_i32_1 = arith.constant 0 : i32
    return %c0_i32, %c0_i32_0 : i32, i32
  }
  func.func @transform_5(%arg0: i32) -> (i32, i32) {
    %c0_i32 = arith.constant 0 : i32
    %c0_i32_0 = arith.constant 0 : i32
    %c0_i32_1 = arith.constant 0 : i32
    return %c0_i32, %c0_i32_0 : i32, i32
  }
  func.func @transform_6(%arg0: i32) -> (i32, i32) {
    %c0_i32 = arith.constant 0 : i32
    %c0_i32_0 = arith.constant 0 : i32
    %c0_i32_1 = arith.constant 0 : i32
    return %c0_i32, %c0_i32_0 : i32, i32
  }
  func.func @transform_7(%arg0: i32) -> (i32, i32) {
    %c0_i32 = arith.constant 0 : i32
    %c0_i32_0 = arith.constant 0 : i32
    %c0_i32_1 = arith.constant 0 : i32
    return %c0_i32, %c0_i32_0 : i32, i32
  }
  func.func @transform_8(%arg0: i32) -> (i32, i32) {
    %c0_i32 = arith.constant 0 : i32
    %c0_i32_0 = arith.constant 0 : i32
    %c0_i32_1 = arith.constant 0 : i32
    return %c0_i32, %c0_i32_0 : i32, i32
  }
  func.func @transform_9(%arg0: i32) -> (i32, i32) {
    %c0_i32 = arith.constant 0 : i32
    %c0_i32_0 = arith.constant 0 : i32
    %c0_i32_1 = arith.constant 0 : i32
    return %c0_i32, %c0_i32_0 : i32, i32
  }
  func.func @transform_10(%arg0: i32) -> (i32, i32) {
    %c0_i32 = arith.constant 0 : i32
    %c0_i32_0 = arith.constant 0 : i32
    %c0_i32_1 = arith.constant 0 : i32
    return %c0_i32, %c0_i32_0 : i32, i32
  }
  func.func @transform_11(%arg0: i32) -> (i32, i32) {
    %c0_i32 = arith.constant 0 : i32
    %c0_i32_0 = arith.constant 0 : i32
    %c0_i32_1 = arith.constant 0 : i32
    return %c0_i32, %c0_i32_0 : i32, i32
  }
  func.func @transform_12(%arg0: i32) -> (i32, i32) {
    %c0_i32 = arith.constant 0 : i32
    %c0_i32_0 = arith.constant 0 : i32
    %c0_i32_1 = arith.constant 0 : i32
    return %c0_i32, %c0_i32_0 : i32, i32
  }
  func.func @transform_13(%arg0: i32) -> (i32, i32) {
    %c0_i32 = arith.constant 0 : i32
    %c0_i32_0 = arith.constant 0 : i32
    %c0_i32_1 = arith.constant 0 : i32
    return %c0_i32, %c0_i32_0 : i32, i32
  }
  func.func @transform_14(%arg0: i32) -> (i32, i32) {
    %c0_i32 = arith.constant 0 : i32
    %c0_i32_0 = arith.constant 0 : i32
    %c0_i32_1 = arith.constant 0 : i32
    return %c0_i32, %c0_i32_0 : i32, i32
  }
  func.func @transform_15(%arg0: i32) -> (i32, i32) {
    %c0_i32 = arith.constant 0 : i32
    %c0_i32_0 = arith.constant 0 : i32
    %c0_i32_1 = arith.constant 0 : i32
    return %c0_i32, %c0_i32_0 : i32, i32
  }
  func.func @transform_16(%arg0: i32) -> (i32, i32) {
    %c0_i32 = arith.constant 0 : i32
    %c0_i32_0 = arith.constant 0 : i32
    %c0_i32_1 = arith.constant 0 : i32
    return %c0_i32, %c0_i32_0 : i32, i32
  }
  func.func @transform_17(%arg0: i32) -> (i32, i32) {
    %c0_i32 = arith.constant 0 : i32
    %c0_i32_0 = arith.constant 0 : i32
    return %arg0, %c0_i32 : i32, i32
  }
}

</mosaic_0001>

<llo_original>
// kernel: tpu_custom_call.1
$region0: #{tpu_custom_call.1}
  #allocation0 [shape = 'u32[]', space=smem, size = 0x4, offset = 0x4, fixed_abs, tag = 'smem constant byte address 0x4 - core index']
  #allocation1 [shape = 'u32[144,128]{1,0:T(1,128)}', space=vmem, size = 0x12000, scoped, tag = 'internal scratch']
  #allocation2 [shape = 'f32[1,1]{1,0:T(1,128)S(1)}', space=vmem, size = 0x200, scoped, tag = 'scoped memory for tpu_custom_call.1']
  %s0 = inlined_call_operand.vmem [shape: f32[32,16], index: 0, kind: input, shape index: {}]
  %s1 = inlined_call_operand.vmem [shape: f32[32,8], index: 1, kind: input, shape index: {}]
  %s2 = inlined_call_operand.vmem [shape: bf16[16,128], index: 2, kind: input, shape index: {}]
  %s3 = inlined_call_operand.vmem [shape: f32[1,128], index: 3, kind: input, shape index: {}]
  %s4 = inlined_call_operand.vmem [shape: f32[1,128], index: 4, kind: input, shape index: {}]
  %s5 = inlined_call_operand.vmem [shape: f32[1,128], index: 5, kind: input, shape index: {}]
  %s6 = inlined_call_operand.vmem [shape: bf16[128,64], index: 6, kind: input, shape index: {}]
  %s7 = inlined_call_operand.vmem [shape: f32[8,64], index: 7, kind: input, shape index: {}]
  %s8 = inlined_call_operand.vmem [shape: f32[1,64], index: 8, kind: input, shape index: {}]
  %s9 = inlined_call_operand.vmem [shape: f32[1,64], index: 9, kind: input, shape index: {}]
  %s10 = inlined_call_operand.vmem [shape: f32[1,64], index: 10, kind: input, shape index: {}]
  %s11 = inlined_call_operand.vmem [shape: bf16[64,32], index: 11, kind: input, shape index: {}]
  %s12 = inlined_call_operand.vmem [shape: f32[1,32], index: 12, kind: input, shape index: {}]
  %s13 = inlined_call_operand.vmem [shape: f32[1,32], index: 13, kind: input, shape index: {}]
  %s14 = inlined_call_operand.vmem [shape: f32[1,32], index: 14, kind: input, shape index: {}]
  %s15 = inlined_call_operand.vmem [shape: f32[1,32], index: 15, kind: input, shape index: {}]
  %s16 = inlined_call_operand.<no memory space> [shape: f32[1,1], index: 16, kind: input, shape index: {}]
  %s17 = inlined_call_operand.vmem [shape: f32[32,1], index: 17, kind: output, shape index: {}]
  %s18 = sld [smem:[#allocation0]]
  $region101: #{tpu_custom_call.1} parent=0
    _
  %s20 = ssub.s32 1, %s18
  %s21 = scalar_select 0, %s20, %s18
  %v22 = vstv %s16
  %23 = vst [vmem:[#allocation2] sm:$0x1] %v22
  loop: start=0, step=1, limit=4
  $region2: #{tpu_custom_call.1} parent=0 // loop_pre_header
    _
  $region3: #{tpu_custom_call.1} parent=0 // loop_header
    %s25 = sphi 0, %s29
    %p26 = scmp.ge.s32.totalorder %s25, 4
    %s35 = sphi 0, %s37
    %s38 = sphi 0, %s35
    %s39 = sphi 0, %s38
    %s55 = sphi 0, %s39
    %s61 = sphi 0, %s63
    %s64 = sphi 0, %s61
    %s65 = sphi 0, %s64
    %s81 = sphi 0, %s65
    %s85 = sphi 0, %s85
    %s87 = sphi 0, %s85
    %s88 = sphi 0, %s87
    %s102 = sphi 0, %s88
    %s106 = sphi 0, %s106
    %s108 = sphi 0, %s106
    %s109 = sphi 0, %s108
    %s123 = sphi 0, %s109
    %s127 = sphi 0, %s127
    %s129 = sphi 0, %s127
    %s130 = sphi 0, %s129
    %s144 = sphi 0, %s130
    %s148 = sphi 0, %s148
    %s150 = sphi 0, %s148
    %s151 = sphi 0, %s150
    %s165 = sphi 0, %s151
    %s169 = sphi 0, %s169
    %s171 = sphi 0, %s169
    %s172 = sphi 0, %s171
    %s186 = sphi 0, %s172
    %s190 = sphi 0, %s190
    %s192 = sphi 0, %s190
    %s193 = sphi 0, %s192
    %s207 = sphi 0, %s193
    %s211 = sphi 0, %s211
    %s213 = sphi 0, %s211
    %s214 = sphi 0, %s213
    %s228 = sphi 0, %s214
    %s232 = sphi 0, %s232
    %s234 = sphi 0, %s232
    %s235 = sphi 0, %s234
    %s249 = sphi 0, %s235
    %s253 = sphi 0, %s253
    %s255 = sphi 0, %s253
    %s256 = sphi 0, %s255
    %s270 = sphi 0, %s256
    %s274 = sphi 0, %s274
    %s276 = sphi 0, %s274
    %s277 = sphi 0, %s276
    %s291 = sphi 0, %s277
    %s295 = sphi 0, %s295
    %s297 = sphi 0, %s295
    %s298 = sphi 0, %s297
    %s312 = sphi 0, %s298
    %s316 = sphi 0, %s316
    %s318 = sphi 0, %s316
    %s319 = sphi 0, %s318
    %s333 = sphi 0, %s319
    %s337 = sphi 0, %s337
    %s339 = sphi 0, %s337
    %s340 = sphi 0, %s339
    %s354 = sphi 0, %s340
    %s358 = sphi 0, %s358
    %s360 = sphi 0, %s358
    %s361 = sphi 0, %s360
    %s375 = sphi 0, %s361
    %s379 = sphi 0, %s379
    %s381 = sphi 0, %s379
    %s382 = sphi 0, %s381
    %s396 = sphi 0, %s382
    %s402 = sphi 0, %s404
    %s405 = sphi 0, %s402
    %s406 = sphi 0, %s405
    %s422 = sphi 0, %s406
  $region4: #{tpu_custom_call.1} parent=0 // loop_header_branch
    %28 = sbr.rel (%p26) target = $region8
  $region5: #{tpu_custom_call.1} parent=0 // loop_body
    %s30 = ssub.s32 %s25, 1
    %s31 = ssub.s32 %s25, 2
    %s32 = sadd.s32 %s25, 1
    %s33 = ssub.s32 %s25, %s32
    %p34 = scmp.eq.s32.totalorder %s33, 0
    %s36 = sadd.s32 %s35, 1
    %s37 = scalar_select %p34, %s35, %s36
    %p40 = pneg %p34
    %p41 = scmp.eq.s32.totalorder %s25, 1
    %p42 = por %p40, %p41
    %p43 = scmp.ne.s32.totalorder %s35, %s38
    %p44 = scmp.eq.s32.totalorder %s25, 0
    %p45 = por %p43, %p44
    %p46 = scmp.ne.s32.totalorder %s35, %s38
    %p47 = scmp.eq.s32.totalorder %s30, 1
    %p48 = por %p46, %p47
    %p49 = scmp.ne.s32.totalorder %s38, %s39
    %p50 = scmp.eq.s32.totalorder %s30, 0
    %p51 = por %p49, %p50
    %p52 = scmp.ne.s32.totalorder %s38, %s39
    %p53 = scmp.eq.s32.totalorder %s31, 1
    %p54 = por %p52, %p53
    %p56 = scmp.ne.s32.totalorder %s39, %s55
    %p57 = scmp.eq.s32.totalorder %s31, 0
    %p58 = por %p56, %p57
    %s59 = ssub.s32 %s25, %s32
    %p60 = scmp.eq.s32.totalorder %s59, 0
    %s62 = sadd.s32 %s61, 1
    %s63 = scalar_select %p60, %s61, %s62
    %p66 = pneg %p60
    %p67 = scmp.eq.s32.totalorder %s25, 1
    %p68 = por %p66, %p67
    %p69 = scmp.ne.s32.totalorder %s61, %s64
    %p70 = scmp.eq.s32.totalorder %s25, 0
    %p71 = por %p69, %p70
    %p72 = scmp.ne.s32.totalorder %s61, %s64
    %p73 = scmp.eq.s32.totalorder %s30, 1
    %p74 = por %p72, %p73
    %p75 = scmp.ne.s32.totalorder %s64, %s65
    %p76 = scmp.eq.s32.totalorder %s30, 0
    %p77 = por %p75, %p76
    %p78 = scmp.ne.s32.totalorder %s64, %s65
    %p79 = scmp.eq.s32.totalorder %s31, 1
    %p80 = por %p78, %p79
    %p82 = scmp.ne.s32.totalorder %s65, %s81
    %p83 = scmp.eq.s32.totalorder %s31, 0
    %p84 = por %p82, %p83
    %s86 = sadd.s32 %s85, 1
    %p89 = scmp.eq.s32.totalorder %s25, 1
    %p90 = scmp.ne.s32.totalorder %s85, %s87
    %p91 = scmp.eq.s32.totalorder %s25, 0
    %p92 = por %p90, %p91
    %p93 = scmp.ne.s32.totalorder %s85, %s87
    %p94 = scmp.eq.s32.totalorder %s30, 1
    %p95 = por %p93, %p94
    %p96 = scmp.ne.s32.totalorder %s87, %s88
    %p97 = scmp.eq.s32.totalorder %s30, 0
    %p98 = por %p96, %p97
    %p99 = scmp.ne.s32.totalorder %s87, %s88
    %p100 = scmp.eq.s32.totalorder %s31, 1
    %p101 = por %p99, %p100
    %p103 = scmp.ne.s32.totalorder %s88, %s102
    %p104 = scmp.eq.s32.totalorder %s31, 0
    %p105 = por %p103, %p104
    %s107 = sadd.s32 %s106, 1
    %p110 = scmp.eq.s32.totalorder %s25, 1
    %p111 = scmp.ne.s32.totalorder %s106, %s108
    %p112 = scmp.eq.s32.totalorder %s25, 0
    %p113 = por %p111, %p112
    %p114 = scmp.ne.s32.totalorder %s106, %s108
    %p115 = scmp.eq.s32.totalorder %s30, 1
    %p116 = por %p114, %p115
    %p117 = scmp.ne.s32.totalorder %s108, %s109
    %p118 = scmp.eq.s32.totalorder %s30, 0
    %p119 = por %p117, %p118
    %p120 = scmp.ne.s32.totalorder %s108, %s109
    %p121 = scmp.eq.s32.totalorder %s31, 1
    %p122 = por %p120, %p121
    %p124 = scmp.ne.s32.totalorder %s109, %s123
    %p125 = scmp.eq.s32.totalorder %s31, 0
    %p126 = por %p124, %p125
    %s128 = sadd.s32 %s127, 1
    %p131 = scmp.eq.s32.totalorder %s25, 1
    %p132 = scmp.ne.s32.totalorder %s127, %s129
    %p133 = scmp.eq.s32.totalorder %s25, 0
    %p134 = por %p132, %p133
    %p135 = scmp.ne.s32.totalorder %s127, %s129
    %p136 = scmp.eq.s32.totalorder %s30, 1
    %p137 = por %p135, %p136
    %p138 = scmp.ne.s32.totalorder %s129, %s130
    %p139 = scmp.eq.s32.totalorder %s30, 0
    %p140 = por %p138, %p139
    %p141 = scmp.ne.s32.totalorder %s129, %s130
    %p142 = scmp.eq.s32.totalorder %s31, 1
    %p143 = por %p141, %p142
    %p145 = scmp.ne.s32.totalorder %s130, %s144
    %p146 = scmp.eq.s32.totalorder %s31, 0
    %p147 = por %p145, %p146
    %s149 = sadd.s32 %s148, 1
    %p152 = scmp.eq.s32.totalorder %s25, 1
    %p153 = scmp.ne.s32.totalorder %s148, %s150
    %p154 = scmp.eq.s32.totalorder %s25, 0
    %p155 = por %p153, %p154
    %p156 = scmp.ne.s32.totalorder %s148, %s150
    %p157 = scmp.eq.s32.totalorder %s30, 1
    %p158 = por %p156, %p157
    %p159 = scmp.ne.s32.totalorder %s150, %s151
    %p160 = scmp.eq.s32.totalorder %s30, 0
    %p161 = por %p159, %p160
    %p162 = scmp.ne.s32.totalorder %s150, %s151
    %p163 = scmp.eq.s32.totalorder %s31, 1
    %p164 = por %p162, %p163
    %p166 = scmp.ne.s32.totalorder %s151, %s165
    %p167 = scmp.eq.s32.totalorder %s31, 0
    %p168 = por %p166, %p167
    %s170 = sadd.s32 %s169, 1
    %p173 = scmp.eq.s32.totalorder %s25, 1
    %p174 = scmp.ne.s32.totalorder %s169, %s171
    %p175 = scmp.eq.s32.totalorder %s25, 0
    %p176 = por %p174, %p175
    %p177 = scmp.ne.s32.totalorder %s169, %s171
    %p178 = scmp.eq.s32.totalorder %s30, 1
    %p179 = por %p177, %p178
    %p180 = scmp.ne.s32.totalorder %s171, %s172
    %p181 = scmp.eq.s32.totalorder %s30, 0
    %p182 = por %p180, %p181
    %p183 = scmp.ne.s32.totalorder %s171, %s172
    %p184 = scmp.eq.s32.totalorder %s31, 1
    %p185 = por %p183, %p184
    %p187 = scmp.ne.s32.totalorder %s172, %s186
    %p188 = scmp.eq.s32.totalorder %s31, 0
    %p189 = por %p187, %p188
    %s191 = sadd.s32 %s190, 1
    %p194 = scmp.eq.s32.totalorder %s25, 1
    %p195 = scmp.ne.s32.totalorder %s190, %s192
    %p196 = scmp.eq.s32.totalorder %s25, 0
    %p197 = por %p195, %p196
    %p198 = scmp.ne.s32.totalorder %s190, %s192
    %p199 = scmp.eq.s32.totalorder %s30, 1
    %p200 = por %p198, %p199
    %p201 = scmp.ne.s32.totalorder %s192, %s193
    %p202 = scmp.eq.s32.totalorder %s30, 0
    %p203 = por %p201, %p202
    %p204 = scmp.ne.s32.totalorder %s192, %s193
    %p205 = scmp.eq.s32.totalorder %s31, 1
    %p206 = por %p204, %p205
    %p208 = scmp.ne.s32.totalorder %s193, %s207
    %p209 = scmp.eq.s32.totalorder %s31, 0
    %p210 = por %p208, %p209
    %s212 = sadd.s32 %s211, 1
    %p215 = scmp.eq.s32.totalorder %s25, 1
    %p216 = scmp.ne.s32.totalorder %s211, %s213
    %p217 = scmp.eq.s32.totalorder %s25, 0
    %p218 = por %p216, %p217
    %p219 = scmp.ne.s32.totalorder %s211, %s213
    %p220 = scmp.eq.s32.totalorder %s30, 1
    %p221 = por %p219, %p220
    %p222 = scmp.ne.s32.totalorder %s213, %s214
    %p223 = scmp.eq.s32.totalorder %s30, 0
    %p224 = por %p222, %p223
    %p225 = scmp.ne.s32.totalorder %s213, %s214
    %p226 = scmp.eq.s32.totalorder %s31, 1
    %p227 = por %p225, %p226
    %p229 = scmp.ne.s32.totalorder %s214, %s228
    %p230 = scmp.eq.s32.totalorder %s31, 0
    %p231 = por %p229, %p230
    %s233 = sadd.s32 %s232, 1
    %p236 = scmp.eq.s32.totalorder %s25, 1
    %p237 = scmp.ne.s32.totalorder %s232, %s234
    %p238 = scmp.eq.s32.totalorder %s25, 0
    %p239 = por %p237, %p238
    %p240 = scmp.ne.s32.totalorder %s232, %s234
    %p241 = scmp.eq.s32.totalorder %s30, 1
    %p242 = por %p240, %p241
    %p243 = scmp.ne.s32.totalorder %s234, %s235
    %p244 = scmp.eq.s32.totalorder %s30, 0
    %p245 = por %p243, %p244
    %p246 = scmp.ne.s32.totalorder %s234, %s235
    %p247 = scmp.eq.s32.totalorder %s31, 1
    %p248 = por %p246, %p247
    %p250 = scmp.ne.s32.totalorder %s235, %s249
    %p251 = scmp.eq.s32.totalorder %s31, 0
    %p252 = por %p250, %p251
    %s254 = sadd.s32 %s253, 1
    %p257 = scmp.eq.s32.totalorder %s25, 1
    %p258 = scmp.ne.s32.totalorder %s253, %s255
    %p259 = scmp.eq.s32.totalorder %s25, 0
    %p260 = por %p258, %p259
    %p261 = scmp.ne.s32.totalorder %s253, %s255
    %p262 = scmp.eq.s32.totalorder %s30, 1
    %p263 = por %p261, %p262
    %p264 = scmp.ne.s32.totalorder %s255, %s256
    %p265 = scmp.eq.s32.totalorder %s30, 0
    %p266 = por %p264, %p265
    %p267 = scmp.ne.s32.totalorder %s255, %s256
    %p268 = scmp.eq.s32.totalorder %s31, 1
    %p269 = por %p267, %p268
    %p271 = scmp.ne.s32.totalorder %s256, %s270
    %p272 = scmp.eq.s32.totalorder %s31, 0
    %p273 = por %p271, %p272
    %s275 = sadd.s32 %s274, 1
    %p278 = scmp.eq.s32.totalorder %s25, 1
    %p279 = scmp.ne.s32.totalorder %s274, %s276
    %p280 = scmp.eq.s32.totalorder %s25, 0
    %p281 = por %p279, %p280
    %p282 = scmp.ne.s32.totalorder %s274, %s276
    %p283 = scmp.eq.s32.totalorder %s30, 1
    %p284 = por %p282, %p283
    %p285 = scmp.ne.s32.totalorder %s276, %s277
    %p286 = scmp.eq.s32.totalorder %s30, 0
    %p287 = por %p285, %p286
    %p288 = scmp.ne.s32.totalorder %s276, %s277
    %p289 = scmp.eq.s32.totalorder %s31, 1
    %p290 = por %p288, %p289
    %p292 = scmp.ne.s32.totalorder %s277, %s291
    %p293 = scmp.eq.s32.totalorder %s31, 0
    %p294 = por %p292, %p293
    %s296 = sadd.s32 %s295, 1
    %p299 = scmp.eq.s32.totalorder %s25, 1
    %p300 = scmp.ne.s32.totalorder %s295, %s297
    %p301 = scmp.eq.s32.totalorder %s25, 0
    %p302 = por %p300, %p301
    %p303 = scmp.ne.s32.totalorder %s295, %s297
    %p304 = scmp.eq.s32.totalorder %s30, 1
    %p305 = por %p303, %p304
    %p306 = scmp.ne.s32.totalorder %s297, %s298
    %p307 = scmp.eq.s32.totalorder %s30, 0
    %p308 = por %p306, %p307
    %p309 = scmp.ne.s32.totalorder %s297, %s298
    %p310 = scmp.eq.s32.totalorder %s31, 1
    %p311 = por %p309, %p310
    %p313 = scmp.ne.s32.totalorder %s298, %s312
    %p314 = scmp.eq.s32.totalorder %s31, 0
    %p315 = por %p313, %p314
    %s317 = sadd.s32 %s316, 1
    %p320 = scmp.eq.s32.totalorder %s25, 1
    %p321 = scmp.ne.s32.totalorder %s316, %s318
    %p322 = scmp.eq.s32.totalorder %s25, 0
    %p323 = por %p321, %p322
    %p324 = scmp.ne.s32.totalorder %s316, %s318
    %p325 = scmp.eq.s32.totalorder %s30, 1
    %p326 = por %p324, %p325
    %p327 = scmp.ne.s32.totalorder %s318, %s319
    %p328 = scmp.eq.s32.totalorder %s30, 0
    %p329 = por %p327, %p328
    %p330 = scmp.ne.s32.totalorder %s318, %s319
    %p331 = scmp.eq.s32.totalorder %s31, 1
    %p332 = por %p330, %p331
    %p334 = scmp.ne.s32.totalorder %s319, %s333
    %p335 = scmp.eq.s32.totalorder %s31, 0
    %p336 = por %p334, %p335
    %s338 = sadd.s32 %s337, 1
    %p341 = scmp.eq.s32.totalorder %s25, 1
    %p342 = scmp.ne.s32.totalorder %s337, %s339
    %p343 = scmp.eq.s32.totalorder %s25, 0
    %p344 = por %p342, %p343
    %p345 = scmp.ne.s32.totalorder %s337, %s339
    %p346 = scmp.eq.s32.totalorder %s30, 1
    %p347 = por %p345, %p346
    %p348 = scmp.ne.s32.totalorder %s339, %s340
    %p349 = scmp.eq.s32.totalorder %s30, 0
    %p350 = por %p348, %p349
    %p351 = scmp.ne.s32.totalorder %s339, %s340
    %p352 = scmp.eq.s32.totalorder %s31, 1
    %p353 = por %p351, %p352
    %p355 = scmp.ne.s32.totalorder %s340, %s354
    %p356 = scmp.eq.s32.totalorder %s31, 0
    %p357 = por %p355, %p356
    %s359 = sadd.s32 %s358, 1
    %p362 = scmp.eq.s32.totalorder %s25, 1
    %p363 = scmp.ne.s32.totalorder %s358, %s360
    %p364 = scmp.eq.s32.totalorder %s25, 0
    %p365 = por %p363, %p364
    %p366 = scmp.ne.s32.totalorder %s358, %s360
    %p367 = scmp.eq.s32.totalorder %s30, 1
    %p368 = por %p366, %p367
    %p369 = scmp.ne.s32.totalorder %s360, %s361
    %p370 = scmp.eq.s32.totalorder %s30, 0
    %p371 = por %p369, %p370
    %p372 = scmp.ne.s32.totalorder %s360, %s361
    %p373 = scmp.eq.s32.totalorder %s31, 1
    %p374 = por %p372, %p373
    %p376 = scmp.ne.s32.totalorder %s361, %s375
    %p377 = scmp.eq.s32.totalorder %s31, 0
    %p378 = por %p376, %p377
    %s380 = sadd.s32 %s379, 1
    %p383 = scmp.eq.s32.totalorder %s25, 1
    %p384 = scmp.ne.s32.totalorder %s379, %s381
    %p385 = scmp.eq.s32.totalorder %s25, 0
    %p386 = por %p384, %p385
    %p387 = scmp.ne.s32.totalorder %s379, %s381
    %p388 = scmp.eq.s32.totalorder %s30, 1
    %p389 = por %p387, %p388
    %p390 = scmp.ne.s32.totalorder %s381, %s382
    %p391 = scmp.eq.s32.totalorder %s30, 0
    %p392 = por %p390, %p391
    %p393 = scmp.ne.s32.totalorder %s381, %s382
    %p394 = scmp.eq.s32.totalorder %s31, 1
    %p395 = por %p393, %p394
    %p397 = scmp.ne.s32.totalorder %s382, %s396
    %p398 = scmp.eq.s32.totalorder %s31, 0
    %p399 = por %p397, %p398
    %s400 = ssub.s32 %s25, %s32
    %p401 = scmp.eq.s32.totalorder %s400, 0
    %s403 = sadd.s32 %s402, 1
    %s404 = scalar_select %p401, %s402, %s403
    %p407 = pneg %p401
    %p408 = scmp.eq.s32.totalorder %s25, 1
    %p409 = por %p407, %p408
    %p410 = scmp.ne.s32.totalorder %s402, %s405
    %p411 = scmp.eq.s32.totalorder %s25, 0
    %p412 = por %p410, %p411
    %p413 = scmp.ne.s32.totalorder %s402, %s405
    %p414 = scmp.eq.s32.totalorder %s30, 1
    %p415 = por %p413, %p414
    %p416 = scmp.ne.s32.totalorder %s405, %s406
    %p417 = scmp.eq.s32.totalorder %s30, 0
    %p418 = por %p416, %p417
    %p419 = scmp.ne.s32.totalorder %s405, %s406
    %p420 = scmp.eq.s32.totalorder %s31, 1
    %p421 = por %p419, %p420
    %p423 = scmp.ne.s32.totalorder %s406, %s422
    %p424 = scmp.eq.s32.totalorder %s31, 0
    %p425 = por %p423, %p424
    %p426 = scmp.le.s32.totalorder 1, %s25
    %p427 = scmp.lt.s32.totalorder %s25, 3
    %p428 = pnand %p426, %p427
    %p429 = pneg %p428
    // Predicated region
    $region9: #{tpu_custom_call.1} parent=5 // pred_check
      _
    $region10: #{tpu_custom_call.1} parent=5 // pred_check_branch
      %431 = sbr.rel (%p428) target = $region12
    $region11: #{tpu_custom_call.1} parent=5 // pred_region
      %s432 = ssub.s32 %s25, 1
      // Predicated region
      $region13: #{tpu_custom_call.1} parent=11 // pred_check
        %p433 = pneg %p98
      $region14: #{tpu_custom_call.1} parent=11 // pred_check_branch
        %435 = sbr.rel (%p433) target = $region16
      $region15: #{tpu_custom_call.1} parent=11 // pred_region
        _
      $region16: #{tpu_custom_call.1} parent=11 // pred_fallthru
        _
      // Predicated region
      $region17: #{tpu_custom_call.1} parent=11 // pred_check
        %p436 = pneg %p119
      $region18: #{tpu_custom_call.1} parent=11 // pred_check_branch
        %438 = sbr.rel (%p436) target = $region20
      $region19: #{tpu_custom_call.1} parent=11 // pred_region
        _
      $region20: #{tpu_custom_call.1} parent=11 // pred_fallthru
        _
      // Predicated region
      $region21: #{tpu_custom_call.1} parent=11 // pred_check
        %p439 = pneg %p140
      $region22: #{tpu_custom_call.1} parent=11 // pred_check_branch
        %441 = sbr.rel (%p439) target = $region24
      $region23: #{tpu_custom_call.1} parent=11 // pred_region
        _
      $region24: #{tpu_custom_call.1} parent=11 // pred_fallthru
        _
      // Predicated region
      $region25: #{tpu_custom_call.1} parent=11 // pred_check
        %p442 = pneg %p161
      $region26: #{tpu_custom_call.1} parent=11 // pred_check_branch
        %444 = sbr.rel (%p442) target = $region28
      $region27: #{tpu_custom_call.1} parent=11 // pred_region
        _
      $region28: #{tpu_custom_call.1} parent=11 // pred_fallthru
        _
      // Predicated region
      $region29: #{tpu_custom_call.1} parent=11 // pred_check
        %p445 = pneg %p182
      $region30: #{tpu_custom_call.1} parent=11 // pred_check_branch
        %447 = sbr.rel (%p445) target = $region32
      $region31: #{tpu_custom_call.1} parent=11 // pred_region
        _
      $region32: #{tpu_custom_call.1} parent=11 // pred_fallthru
        _
      // Predicated region
      $region33: #{tpu_custom_call.1} parent=11 // pred_check
        %p448 = pneg %p203
      $region34: #{tpu_custom_call.1} parent=11 // pred_check_branch
        %450 = sbr.rel (%p448) target = $region36
      $region35: #{tpu_custom_call.1} parent=11 // pred_region
        _
      $region36: #{tpu_custom_call.1} parent=11 // pred_fallthru
        _
      // Predicated region
      $region37: #{tpu_custom_call.1} parent=11 // pred_check
        %p451 = pneg %p224
      $region38: #{tpu_custom_call.1} parent=11 // pred_check_branch
        %453 = sbr.rel (%p451) target = $region40
      $region39: #{tpu_custom_call.1} parent=11 // pred_region
        _
      $region40: #{tpu_custom_call.1} parent=11 // pred_fallthru
        _
      // Predicated region
      $region41: #{tpu_custom_call.1} parent=11 // pred_check
        %p454 = pneg %p245
      $region42: #{tpu_custom_call.1} parent=11 // pred_check_branch
        %456 = sbr.rel (%p454) target = $region44
      $region43: #{tpu_custom_call.1} parent=11 // pred_region
        _
      $region44: #{tpu_custom_call.1} parent=11 // pred_fallthru
        _
      // Predicated region
      $region45: #{tpu_custom_call.1} parent=11 // pred_check
        %p457 = pneg %p266
      $region46: #{tpu_custom_call.1} parent=11 // pred_check_branch
        %459 = sbr.rel (%p457) target = $region48
      $region47: #{tpu_custom_call.1} parent=11 // pred_region
        _
      $region48: #{tpu_custom_call.1} parent=11 // pred_fallthru
        _
      // Predicated region
      $region49: #{tpu_custom_call.1} parent=11 // pred_check
        %p460 = pneg %p287
      $region50: #{tpu_custom_call.1} parent=11 // pred_check_branch
        %462 = sbr.rel (%p460) target = $region52
      $region51: #{tpu_custom_call.1} parent=11 // pred_region
        _
      $region52: #{tpu_custom_call.1} parent=11 // pred_fallthru
        _
      // Predicated region
      $region53: #{tpu_custom_call.1} parent=11 // pred_check
        %p463 = pneg %p308
      $region54: #{tpu_custom_call.1} parent=11 // pred_check_branch
        %465 = sbr.rel (%p463) target = $region56
      $region55: #{tpu_custom_call.1} parent=11 // pred_region
        _
      $region56: #{tpu_custom_call.1} parent=11 // pred_fallthru
        _
      // Predicated region
      $region57: #{tpu_custom_call.1} parent=11 // pred_check
        %p466 = pneg %p329
      $region58: #{tpu_custom_call.1} parent=11 // pred_check_branch
        %468 = sbr.rel (%p466) target = $region60
      $region59: #{tpu_custom_call.1} parent=11 // pred_region
        _
      $region60: #{tpu_custom_call.1} parent=11 // pred_fallthru
        _
      // Predicated region
      $region61: #{tpu_custom_call.1} parent=11 // pred_check
        %p469 = pneg %p350
      $region62: #{tpu_custom_call.1} parent=11 // pred_check_branch
        %471 = sbr.rel (%p469) target = $region64
      $region63: #{tpu_custom_call.1} parent=11 // pred_region
        _
      $region64: #{tpu_custom_call.1} parent=11 // pred_fallthru
        _
      // Predicated region
      $region65: #{tpu_custom_call.1} parent=11 // pred_check
        %p472 = pneg %p371
      $region66: #{tpu_custom_call.1} parent=11 // pred_check_branch
        %474 = sbr.rel (%p472) target = $region68
      $region67: #{tpu_custom_call.1} parent=11 // pred_region
        _
      $region68: #{tpu_custom_call.1} parent=11 // pred_fallthru
        _
      // Predicated region
      $region69: #{tpu_custom_call.1} parent=11 // pred_check
        %p475 = pneg %p392
      $region70: #{tpu_custom_call.1} parent=11 // pred_check_branch
        %477 = sbr.rel (%p475) target = $region72
      $region71: #{tpu_custom_call.1} parent=11 // pred_region
        _
      $region72: #{tpu_custom_call.1} parent=11 // pred_fallthru
        _
    $region12: #{tpu_custom_call.1} parent=5 // pred_fallthru
      _
    %p478 = scmp.lt.s32.totalorder %s25, 2
    // Predicated region
    $region73: #{tpu_custom_call.1} parent=5 // pred_check
      %p479 = pneg %p478
    $region74: #{tpu_custom_call.1} parent=5 // pred_check_branch
      %481 = sbr.rel (%p479) target = $region76
    $region75: #{tpu_custom_call.1} parent=5 // pred_region
      // Predicated region
      $region77: #{tpu_custom_call.1} parent=75 // pred_check
        %p482 = pneg %p45
      $region78: #{tpu_custom_call.1} parent=75 // pred_check_branch
        %484 = sbr.rel (%p482) target = $region80
      $region79: #{tpu_custom_call.1} parent=75 // pred_region
        %s485 = smul.u32 2, %s25
        %p486 = scmp.lt.s32.totalorder %s485, 3
        %s487 = scalar_select %p486, %s485, 3
        %s488 = smul.addr %s487, 8
        %s489 = scalar_lea.vmem %s0, %s488
        %s490 = smul.u32 2, %s25
      $region80: #{tpu_custom_call.1} parent=75 // pred_fallthru
        _
      // Predicated region
      $region81: #{tpu_custom_call.1} parent=75 // pred_check
        %p491 = pneg %p71
      $region82: #{tpu_custom_call.1} parent=75 // pred_check_branch
        %493 = sbr.rel (%p491) target = $region84
      $region83: #{tpu_custom_call.1} parent=75 // pred_region
        %s494 = smul.u32 2, %s25
        %p495 = scmp.lt.s32.totalorder %s494, 3
        %s496 = scalar_select %p495, %s494, 3
        %s497 = smul.addr %s496, 8
        %s498 = scalar_lea.vmem %s1, %s497
        %s499 = smul.u32 2, %s25
      $region84: #{tpu_custom_call.1} parent=75 // pred_fallthru
        _
    $region76: #{tpu_custom_call.1} parent=5 // pred_fallthru
      _
    %p500 = scmp.le.s32.totalorder 1, %s25
    %p501 = scmp.lt.s32.totalorder %s25, 3
    %p502 = pnand %p500, %p501
    %p503 = pneg %p502
    // Predicated region
    $region85: #{tpu_custom_call.1} parent=5 // pred_check
      _
    $region86: #{tpu_custom_call.1} parent=5 // pred_check_branch
      %505 = sbr.rel (%p502) target = $region88
    $region87: #{tpu_custom_call.1} parent=5 // pred_region
      %s506 = ssub.s32 %s25, 1
      %s507 = smul.u32 2, %s30
      %p508 = scmp.lt.s32.totalorder %s507, 3
      %s509 = scalar_select %p508, %s507, 3
      %s510 = smul.addr %s509, 8
      %s511 = scalar_lea.vmem %s0, %s510
      %p512 = pneg %p51
      %p513 = pneg %p48
      %s514 = smul.u32 2, %s30
      %p515 = scmp.lt.s32.totalorder %s514, 3
      %s516 = scalar_select %p515, %s514, 3
      %s517 = smul.addr %s516, 8
      %s518 = scalar_lea.vmem %s1, %s517
      %p519 = pneg %p77
      %p520 = pneg %p74
      %p521 = pneg %p98
      %p522 = pneg %p95
      %p523 = pneg %p119
      %p524 = pneg %p116
      %p525 = pneg %p140
      %p526 = pneg %p137
      %p527 = pneg %p161
      %p528 = pneg %p158
      %p529 = pneg %p182
      %p530 = pneg %p179
      %p531 = pneg %p203
      %p532 = pneg %p200
      %p533 = pneg %p224
      %p534 = pneg %p221
      %p535 = pneg %p245
      %p536 = pneg %p242
      %p537 = pneg %p266
      %p538 = pneg %p263
      %p539 = pneg %p287
      %p540 = pneg %p284
      %p541 = pneg %p308
      %p542 = pneg %p305
      %p543 = pneg %p329
      %p544 = pneg %p326
      %p545 = pneg %p350
      %p546 = pneg %p347
      %p547 = pneg %p371
      %p548 = pneg %p368
      %p549 = pneg %p392
      %p550 = pneg %p389
      %p551 = pneg %p418
      %p552 = pneg %p415
      %s553 = smul.u32 2, %s30
      %p554 = scmp.lt.s32.totalorder %s553, 3
      %s555 = scalar_select %p554, %s553, 3
      %s556 = smul.addr %s555, 8
      %s557 = scalar_lea.vmem %s17, %s556
      %s558 = smul.u32 2, %s30
      %p559 = scmp.lt.s32.totalorder %s558, 3
      %s560 = scalar_select %p559, %s558, 3
      %s561 = smul.addr %s560, 8
      %s562 = scalar_lea.vmem %s0, %s561
      %s563 = smul.u32 2, %s30
      %s564 = smul.u32 2, %s30
      %p565 = scmp.lt.s32.totalorder %s564, 3
      %s566 = scalar_select %p565, %s564, 3
      %s567 = smul.addr %s566, 8
      %s568 = scalar_lea.vmem %s1, %s567
      %s569 = smul.u32 2, %s30
      %s570 = smul.u32 2, %s30
      %p571 = scmp.lt.s32.totalorder %s570, 3
      %s572 = scalar_select %p571, %s570, 3
      %s573 = smul.addr %s572, 8
      %s574 = scalar_lea.vmem %s17, %s573
      %s575 = smul.u32 2, %s30
      %v577 = vld [vmem:[%s562] sm:$0xff]
      %v578 = vld [vmem:[%s562 + $0x8] sm:$0xff]
      %v579 = vld [vmem:[%s568] sm:$0xff]
      %v580 = vld [vmem:[%s568 + $0x8] sm:$0xff]
      %v581 = vpack.c.bf16 %v578, %v577
      %v582 = vld [vmem:[%s2] sm:$0xf]
      %v583 = vld [vmem:[%s2 + $0x4] sm:$0xf]
      %v584 = vld [vmem:[%s3] sm:$0x1]
      %v586 = vlaneseq
      %v587 = vshrl.u32 %v586, 7
      %v588 = vsub.s32 0, %v587
      %v589 = vrot.slane %v584, %v588
      %v593 = vunpack.c.l.b16 %v582
      %v594 = vunpack.c.l.b16 %v583
      %v595 = vpack.c.b16 %v594, %v593
      %vm597 = vcmask 130048
      %v599 = vsel %vm597, %v581, 0
      %601 = vmatprep.subr.bf16.mxu0 0
      %602 = vmatpush1.bf16.msra.mxu0 %v595
      %603 = vmatprep.subr.bf16.mxu0 0
      %604 = vmatpush1.bf16.msra.mxu0 0
      %605 = vmatprep.subr.bf16.mxu0 0
      %606 = vmatpush1.bf16.msra.mxu0 0
      %607 = vmatprep.subr.bf16.mxu0 0
      %608 = vmatpush1.bf16.msra.mxu0 0
      %609 = vmatprep.subr.bf16.mxu0 0
      %610 = vmatpush1.bf16.msra.mxu0 0
      %611 = vmatprep.subr.bf16.mxu0 0
      %612 = vmatpush1.bf16.msra.mxu0 0
      %613 = vmatprep.subr.bf16.mxu0 0
      %614 = vmatpush1.bf16.msra.mxu0 0
      %615 = vmatprep.subr.bf16.mxu0 0
      %616 = vmatpush1.bf16.msra.mxu0 0
      %617 = vmatprep.subr.bf16.mxu0 0
      %618 = vmatpush1.bf16.msra.mxu0 0
      %619 = vmatprep.subr.bf16.mxu0 0
      %620 = vmatpush1.bf16.msra.mxu0 0
      %621 = vmatprep.subr.bf16.mxu0 0
      %622 = vmatpush1.bf16.msra.mxu0 0
      %623 = vmatprep.subr.bf16.mxu0 0
      %624 = vmatpush1.bf16.msra.mxu0 0
      %625 = vmatprep.subr.bf16.mxu0 0
      %626 = vmatpush1.bf16.msra.mxu0 0
      %627 = vmatprep.subr.bf16.mxu0 0
      %628 = vmatpush1.bf16.msra.mxu0 0
      %629 = vmatprep.subr.bf16.mxu0 0
      %630 = vmatpush1.bf16.msra.mxu0 0
      %631 = vmatprep.subr.bf16.mxu0 0
      %632 = vmatpush1.bf16.msra.mxu0 0
      %633 = vmatprep.mubr.bf16.mxu0 0
      %634 = vmatmul.mubr.bf16.gmra.mrb[0].mxu0 %v599
      %v635 = vpop.f32.mrb[0].mxu0
      %v636 = vadd.f32 %v589, %v635
      %v637 = vpop.f32.mrb[0].mxu0
      %v638 = vpop.f32.mrb[0].mxu0
      %v639 = vadd.f32 %v589, %v638
      %v640 = vpop.f32.mrb[0].mxu0
      %641 = vdwg.mxu0
      %v642 = vld [vmem:[%s4] sm:$0x1]
      %v643 = vld [vmem:[%s5] sm:$0x1]
      %644 = vadd.xlane.f32.xlu0 %v636
      %v645 = vpop.xlane.xlu0 %644
      %646 = vadd.xlane.f32.xlu0 %v639
      %v647 = vpop.xlane.xlu0 %646
      %v648 = vmul.f32 %v636, %v636
      %v649 = vmul.f32 %v639, %v639
      %650 = vadd.xlane.f32.xlu0 %v648
      %v651 = vpop.xlane.xlu0 %650
      %652 = vadd.xlane.f32.xlu0 %v649
      %v653 = vpop.xlane.xlu0 %652
      %v654 = vmul.f32 %v645, 0.0078125
      %v655 = vmul.f32 %v647, 0.0078125
      %v656 = vmul.f32 %v651, 0.0078125
      %v657 = vmul.f32 %v653, 0.0078125
      %v658 = vmul.f32 %v654, %v654
      %v659 = vmul.f32 %v655, %v655
      %v660 = vsub.f32 %v656, %v658
      %v661 = vsub.f32 %v657, %v659
      %v662 = vmax.f32 %v660, 0.0
      %v663 = vmax.f32 %v661, 0.0
      %v664 = vsub.f32 %v636, %v654
      %v665 = vsub.f32 %v639, %v655
      %v666 = vadd.f32 %v662, 1e-05
      %v667 = vadd.f32 %v663, 1e-05
      %v668 = vrsqrt.pop %v666
      %v669 = vrsqrt.pop %v667
      %v670 = vmul.f32 %v664, %v668
      %v671 = vmul.f32 %v665, %v669
      %v673 = vlaneseq
      %v674 = vshrl.u32 %v673, 7
      %v675 = vsub.s32 0, %v674
      %v676 = vrot.slane %v642, %v675
      %v678 = vmul.f32 %v670, %v676
      %v679 = vmul.f32 %v671, %v676
      %v681 = vlaneseq
      %v682 = vshrl.u32 %v681, 7
      %v683 = vsub.s32 0, %v682
      %v684 = vrot.slane %v643, %v683
      %v686 = vadd.f32 %v678, %v684
      %v687 = vadd.f32 %v679, %v684
      %v688 = vmax.f32 %v686, 0.0
      %v689 = vmax.f32 %v687, 0.0
      %v690 = vpack.c.bf16 %v689, %v688
      %v691 = vld [vmem:[%s6] sm:$0xf]
      %v692 = vld [vmem:[%s6 + $0x4] sm:$0xf]
      %v693 = vld [vmem:[%s6 + $0x8] sm:$0xf]
      %v694 = vld [vmem:[%s6 + $0xc] sm:$0xf]
      %v695 = vld [vmem:[%s6 + $0x10] sm:$0xf]
      %v696 = vld [vmem:[%s6 + $0x14] sm:$0xf]
      %v697 = vld [vmem:[%s6 + $0x18] sm:$0xf]
      %v698 = vld [vmem:[%s6 + $0x1c] sm:$0xf]
      %v699 = vld [vmem:[%s6 + $0x20] sm:$0xf]
      %v700 = vld [vmem:[%s6 + $0x24] sm:$0xf]
      %v701 = vld [vmem:[%s6 + $0x28] sm:$0xf]
      %v702 = vld [vmem:[%s6 + $0x2c] sm:$0xf]
      %v703 = vld [vmem:[%s6 + $0x30] sm:$0xf]
      %v704 = vld [vmem:[%s6 + $0x34] sm:$0xf]
      %v705 = vld [vmem:[%s6 + $0x38] sm:$0xf]
      %v706 = vld [vmem:[%s6 + $0x3c] sm:$0xf]
      %v707 = vld [vmem:[%s8] sm:$0x1]
      %v709 = vlaneseq
      %v710 = vshrl.u32 %v709, 7
      %v711 = vsub.s32 0, %v710
      %v712 = vrot.slane %v707, %v711
      %v730 = vunpack.c.l.b16 %v691
      %v731 = vunpack.c.l.b16 %v692
      %v732 = vunpack.c.l.b16 %v693
      %v733 = vunpack.c.l.b16 %v694
      %v734 = vunpack.c.l.b16 %v695
      %v735 = vunpack.c.l.b16 %v696
      %v736 = vunpack.c.l.b16 %v697
      %v737 = vunpack.c.l.b16 %v698
      %v738 = vunpack.c.l.b16 %v699
      %v739 = vunpack.c.l.b16 %v700
      %v740 = vunpack.c.l.b16 %v701
      %v741 = vunpack.c.l.b16 %v702
      %v742 = vunpack.c.l.b16 %v703
      %v743 = vunpack.c.l.b16 %v704
      %v744 = vunpack.c.l.b16 %v705
      %v745 = vunpack.c.l.b16 %v706
      %v746 = vpack.c.b16 %v731, %v730
      %v747 = vpack.c.b16 %v733, %v732
      %v748 = vpack.c.b16 %v735, %v734
      %v749 = vpack.c.b16 %v737, %v736
      %v750 = vpack.c.b16 %v739, %v738
      %v751 = vpack.c.b16 %v741, %v740
      %v752 = vpack.c.b16 %v743, %v742
      %v753 = vpack.c.b16 %v745, %v744
      %762 = vmatprep.subr.bf16.mxu0 0
      %763 = vmatpush1.bf16.msra.mxu0 %v746
      %764 = vmatprep.subr.bf16.mxu0 0
      %765 = vmatpush1.bf16.msra.mxu0 %v747
      %766 = vmatprep.subr.bf16.mxu0 0
      %767 = vmatpush1.bf16.msra.mxu0 %v748
      %768 = vmatprep.subr.bf16.mxu0 0
      %769 = vmatpush1.bf16.msra.mxu0 %v749
      %770 = vmatprep.subr.bf16.mxu0 0
      %771 = vmatpush1.bf16.msra.mxu0 %v750
      %772 = vmatprep.subr.bf16.mxu0 0
      %773 = vmatpush1.bf16.msra.mxu0 %v751
      %774 = vmatprep.subr.bf16.mxu0 0
      %775 = vmatpush1.bf16.msra.mxu0 %v752
      %776 = vmatprep.subr.bf16.mxu0 0
      %777 = vmatpush1.bf16.msra.mxu0 %v753
      %778 = vmatprep.subr.bf16.mxu0 0
      %779 = vmatpush1.bf16.msra.mxu0 0
      %780 = vmatprep.subr.bf16.mxu0 0
      %781 = vmatpush1.bf16.msra.mxu0 0
      %782 = vmatprep.subr.bf16.mxu0 0
      %783 = vmatpush1.bf16.msra.mxu0 0
      %784 = vmatprep.subr.bf16.mxu0 0
      %785 = vmatpush1.bf16.msra.mxu0 0
      %786 = vmatprep.subr.bf16.mxu0 0
      %787 = vmatpush1.bf16.msra.mxu0 0
      %788 = vmatprep.subr.bf16.mxu0 0
      %789 = vmatpush1.bf16.msra.mxu0 0
      %790 = vmatprep.subr.bf16.mxu0 0
      %791 = vmatpush1.bf16.msra.mxu0 0
      %792 = vmatprep.subr.bf16.mxu0 0
      %793 = vmatpush1.bf16.msra.mxu0 0
      %794 = vmatprep.mubr.bf16.mxu0 0
      %795 = vmatmul.mubr.bf16.gmra.mrb[0].mxu0 %v690
      %v796 = vpop.f32.mrb[0].mxu0
      %v797 = vadd.f32 %v712, %v796
      %v798 = vpop.f32.mrb[0].mxu0
      %v799 = vpop.f32.mrb[0].mxu0
      %v800 = vadd.f32 %v712, %v799
      %v801 = vpop.f32.mrb[0].mxu0
      %802 = vdwg.mxu0
      %v803 = vld [vmem:[%s7] sm:$0xff]
      %805 = vset.pattern.permute.xlu0 0
      %806 = vperm.xlu0 %805, %v579
      %v807 = vpop.permute.xlu0 %806
      %810 = vset.pattern.permute.xlu0 0
      %811 = vperm.xlu0 %810, %v580
      %v812 = vpop.permute.xlu0 %811
      %v814 = vlaneseq
      %v815 = vshrl.u32 %v814, 7
      %v816 = vsub.s32 0, %v815
      %v817 = vrot.slane %v803, %v816
      %v818 = vmul.f32 %v807, %v817
      %v819 = vmul.f32 %v812, %v817
      %v820 = vadd.f32 %v797, %v818
      %v821 = vadd.f32 %v800, %v819
      %822 = vset.pattern.permute.xlu0 1
      %823 = vperm.xlu0 %822, %v579
      %v824 = vpop.permute.xlu0 %823
      %826 = vset.pattern.permute.xlu0 1
      %827 = vperm.xlu0 %826, %v580
      %v828 = vpop.permute.xlu0 %827
      %v830 = vlaneseq
      %v831 = vshrl.u32 %v830, 7
      %v832 = vsub.s32 1, %v831
      %v833 = vrot.slane %v803, %v832
      %v834 = vmul.f32 %v824, %v833
      %v835 = vmul.f32 %v828, %v833
      %v836 = vadd.f32 %v820, %v834
      %v837 = vadd.f32 %v821, %v835
      %838 = vset.pattern.permute.xlu0 2
      %839 = vperm.xlu0 %838, %v579
      %v840 = vpop.permute.xlu0 %839
      %842 = vset.pattern.permute.xlu0 2
      %843 = vperm.xlu0 %842, %v580
      %v844 = vpop.permute.xlu0 %843
      %v846 = vlaneseq
      %v847 = vshrl.u32 %v846, 7
      %v848 = vsub.s32 2, %v847
      %v849 = vrot.slane %v803, %v848
      %v850 = vmul.f32 %v840, %v849
      %v851 = vmul.f32 %v844, %v849
      %v852 = vadd.f32 %v836, %v850
      %v853 = vadd.f32 %v837, %v851
      %854 = vset.pattern.permute.xlu0 3
      %855 = vperm.xlu0 %854, %v579
      %v856 = vpop.permute.xlu0 %855
      %858 = vset.pattern.permute.xlu0 3
      %859 = vperm.xlu0 %858, %v580
      %v860 = vpop.permute.xlu0 %859
      %v862 = vlaneseq
      %v863 = vshrl.u32 %v862, 7
      %v864 = vsub.s32 3, %v863
      %v865 = vrot.slane %v803, %v864
      %v866 = vmul.f32 %v856, %v865
      %v867 = vmul.f32 %v860, %v865
      %v868 = vadd.f32 %v852, %v866
      %v869 = vadd.f32 %v853, %v867
      %870 = vset.pattern.permute.xlu0 4
      %871 = vperm.xlu0 %870, %v579
      %v872 = vpop.permute.xlu0 %871
      %874 = vset.pattern.permute.xlu0 4
      %875 = vperm.xlu0 %874, %v580
      %v876 = vpop.permute.xlu0 %875
      %v878 = vlaneseq
      %v879 = vshrl.u32 %v878, 7
      %v880 = vsub.s32 4, %v879
      %v881 = vrot.slane %v803, %v880
      %v882 = vmul.f32 %v872, %v881
      %v883 = vmul.f32 %v876, %v881
      %v884 = vadd.f32 %v868, %v882
      %v885 = vadd.f32 %v869, %v883
      %886 = vset.pattern.permute.xlu0 5
      %887 = vperm.xlu0 %886, %v579
      %v888 = vpop.permute.xlu0 %887
      %890 = vset.pattern.permute.xlu0 5
      %891 = vperm.xlu0 %890, %v580
      %v892 = vpop.permute.xlu0 %891
      %v894 = vlaneseq
      %v895 = vshrl.u32 %v894, 7
      %v896 = vsub.s32 5, %v895
      %v897 = vrot.slane %v803, %v896
      %v898 = vmul.f32 %v888, %v897
      %v899 = vmul.f32 %v892, %v897
      %v900 = vadd.f32 %v884, %v898
      %v901 = vadd.f32 %v885, %v899
      %902 = vset.pattern.permute.xlu0 6
      %903 = vperm.xlu0 %902, %v579
      %v904 = vpop.permute.xlu0 %903
      %906 = vset.pattern.permute.xlu0 6
      %907 = vperm.xlu0 %906, %v580
      %v908 = vpop.permute.xlu0 %907
      %v910 = vlaneseq
      %v911 = vshrl.u32 %v910, 7
      %v912 = vsub.s32 6, %v911
      %v913 = vrot.slane %v803, %v912
      %v914 = vmul.f32 %v904, %v913
      %v915 = vmul.f32 %v908, %v913
      %v916 = vadd.f32 %v900, %v914
      %v917 = vadd.f32 %v901, %v915
      %918 = vset.pattern.permute.xlu0 7
      %919 = vperm.xlu0 %918, %v579
      %v920 = vpop.permute.xlu0 %919
      %922 = vset.pattern.permute.xlu0 7
      %923 = vperm.xlu0 %922, %v580
      %v924 = vpop.permute.xlu0 %923
      %v926 = vlaneseq
      %v927 = vshrl.u32 %v926, 7
      %v928 = vsub.s32 7, %v927
      %v929 = vrot.slane %v803, %v928
      %v930 = vmul.f32 %v920, %v929
      %v931 = vmul.f32 %v924, %v929
      %v932 = vadd.f32 %v916, %v930
      %v933 = vadd.f32 %v917, %v931
      %v934 = vld [vmem:[%s9] sm:$0x1]
      %v935 = vld [vmem:[%s10] sm:$0x1]
      %vm936 = vcmask 523264
      %v937 = vsel %vm936, %v932, 0.0
      %938 = vadd.xlane.f32.xlu0 %v937
      %v939 = vpop.xlane.xlu0 %938
      %v940 = vsel %vm936, %v933, 0.0
      %941 = vadd.xlane.f32.xlu0 %v940
      %v942 = vpop.xlane.xlu0 %941
      %v943 = vmul.f32 %v932, %v932
      %v944 = vmul.f32 %v933, %v933
      %v945 = vsel %vm936, %v943, 0.0
      %946 = vadd.xlane.f32.xlu0 %v945
      %v947 = vpop.xlane.xlu0 %946
      %v948 = vsel %vm936, %v944, 0.0
      %949 = vadd.xlane.f32.xlu0 %v948
      %v950 = vpop.xlane.xlu0 %949
      %v951 = vmul.f32 %v939, 0.015625
      %v952 = vmul.f32 %v942, 0.015625
      %v953 = vmul.f32 %v947, 0.015625
      %v954 = vmul.f32 %v950, 0.015625
      %v955 = vmul.f32 %v951, %v951
      %v956 = vmul.f32 %v952, %v952
      %v957 = vsub.f32 %v953, %v955
      %v958 = vsub.f32 %v954, %v956
      %v959 = vmax.f32 %v957, 0.0
      %v960 = vmax.f32 %v958, 0.0
      %v961 = vsub.f32 %v932, %v951
      %v962 = vsub.f32 %v933, %v952
      %v963 = vadd.f32 %v959, 1e-05
      %v964 = vadd.f32 %v960, 1e-05
      %v965 = vrsqrt.pop %v963
      %v966 = vrsqrt.pop %v964
      %v967 = vmul.f32 %v961, %v965
      %v968 = vmul.f32 %v962, %v966
      %v970 = vlaneseq
      %v971 = vshrl.u32 %v970, 7
      %v972 = vsub.s32 0, %v971
      %v973 = vrot.slane %v934, %v972
      %v975 = vmul.f32 %v967, %v973
      %v976 = vmul.f32 %v968, %v973
      %v978 = vlaneseq
      %v979 = vshrl.u32 %v978, 7
      %v980 = vsub.s32 0, %v979
      %v981 = vrot.slane %v935, %v980
      %v983 = vadd.f32 %v975, %v981
      %v984 = vadd.f32 %v976, %v981
      %v985 = vmax.f32 %v983, 0.0
      %v986 = vmax.f32 %v984, 0.0
      %v987 = vpack.c.bf16 %v986, %v985
      %v988 = vld [vmem:[%s11] sm:$0xf]
      %v989 = vld [vmem:[%s11 + $0x4] sm:$0xf]
      %v990 = vld [vmem:[%s11 + $0x8] sm:$0xf]
      %v991 = vld [vmem:[%s11 + $0xc] sm:$0xf]
      %v992 = vld [vmem:[%s11 + $0x10] sm:$0xf]
      %v993 = vld [vmem:[%s11 + $0x14] sm:$0xf]
      %v994 = vld [vmem:[%s11 + $0x18] sm:$0xf]
      %v995 = vld [vmem:[%s11 + $0x1c] sm:$0xf]
      %v996 = vld [vmem:[%s12] sm:$0x1]
      %v998 = vlaneseq
      %v999 = vshrl.u32 %v998, 7
      %v1000 = vsub.s32 0, %v999
      %v1001 = vrot.slane %v996, %v1000
      %v1011 = vunpack.c.l.b16 %v988
      %v1012 = vunpack.c.l.b16 %v989
      %v1013 = vunpack.c.l.b16 %v990
      %v1014 = vunpack.c.l.b16 %v991
      %v1015 = vunpack.c.l.b16 %v992
      %v1016 = vunpack.c.l.b16 %v993
      %v1017 = vunpack.c.l.b16 %v994
      %v1018 = vunpack.c.l.b16 %v995
      %v1019 = vpack.c.b16 %v1012, %v1011
      %v1020 = vpack.c.b16 %v1014, %v1013
      %v1021 = vpack.c.b16 %v1016, %v1015
      %v1022 = vpack.c.b16 %v1018, %v1017
      %v1028 = vsel %vm936, %v987, 0
      %1030 = vmatprep.subr.bf16.mxu0 0
      %1031 = vmatpush1.bf16.msra.mxu0 %v1019
      %1032 = vmatprep.subr.bf16.mxu0 0
      %1033 = vmatpush1.bf16.msra.mxu0 %v1020
      %1034 = vmatprep.subr.bf16.mxu0 0
      %1035 = vmatpush1.bf16.msra.mxu0 %v1021
      %1036 = vmatprep.subr.bf16.mxu0 0
      %1037 = vmatpush1.bf16.msra.mxu0 %v1022
      %1038 = vmatprep.subr.bf16.mxu0 0
      %1039 = vmatpush1.bf16.msra.mxu0 0
      %1040 = vmatprep.subr.bf16.mxu0 0
      %1041 = vmatpush1.bf16.msra.mxu0 0
      %1042 = vmatprep.subr.bf16.mxu0 0
      %1043 = vmatpush1.bf16.msra.mxu0 0
      %1044 = vmatprep.subr.bf16.mxu0 0
      %1045 = vmatpush1.bf16.msra.mxu0 0
      %1046 = vmatprep.subr.bf16.mxu0 0
      %1047 = vmatpush1.bf16.msra.mxu0 0
      %1048 = vmatprep.subr.bf16.mxu0 0
      %1049 = vmatpush1.bf16.msra.mxu0 0
      %1050 = vmatprep.subr.bf16.mxu0 0
      %1051 = vmatpush1.bf16.msra.mxu0 0
      %1052 = vmatprep.subr.bf16.mxu0 0
      %1053 = vmatpush1.bf16.msra.mxu0 0
      %1054 = vmatprep.subr.bf16.mxu0 0
      %1055 = vmatpush1.bf16.msra.mxu0 0
      %1056 = vmatprep.subr.bf16.mxu0 0
      %1057 = vmatpush1.bf16.msra.mxu0 0
      %1058 = vmatprep.subr.bf16.mxu0 0
      %1059 = vmatpush1.bf16.msra.mxu0 0
      %1060 = vmatprep.subr.bf16.mxu0 0
      %1061 = vmatpush1.bf16.msra.mxu0 0
      %1062 = vmatprep.mubr.bf16.mxu0 0
      %1063 = vmatmul.mubr.bf16.gmra.mrb[0].mxu0 %v1028
      %v1064 = vpop.f32.mrb[0].mxu0
      %v1065 = vadd.f32 %v1001, %v1064
      %v1066 = vpop.f32.mrb[0].mxu0
      %v1067 = vpop.f32.mrb[0].mxu0
      %v1068 = vadd.f32 %v1001, %v1067
      %v1069 = vpop.f32.mrb[0].mxu0
      %1070 = vdwg.mxu0
      %v1071 = vld [vmem:[%s13] sm:$0x1]
      %v1072 = vld [vmem:[%s14] sm:$0x1]
      %vm1073 = vcmask 261120
      %v1074 = vsel %vm1073, %v1065, 0.0
      %1075 = vadd.xlane.f32.xlu0 %v1074
      %v1076 = vpop.xlane.xlu0 %1075
      %v1077 = vsel %vm1073, %v1068, 0.0
      %1078 = vadd.xlane.f32.xlu0 %v1077
      %v1079 = vpop.xlane.xlu0 %1078
      %v1080 = vmul.f32 %v1065, %v1065
      %v1081 = vmul.f32 %v1068, %v1068
      %v1082 = vsel %vm1073, %v1080, 0.0
      %1083 = vadd.xlane.f32.xlu0 %v1082
      %v1084 = vpop.xlane.xlu0 %1083
      %v1085 = vsel %vm1073, %v1081, 0.0
      %1086 = vadd.xlane.f32.xlu0 %v1085
      %v1087 = vpop.xlane.xlu0 %1086
      %v1088 = vmul.f32 %v1076, 0.03125
      %v1089 = vmul.f32 %v1079, 0.03125
      %v1090 = vmul.f32 %v1084, 0.03125
      %v1091 = vmul.f32 %v1087, 0.03125
      %v1092 = vmul.f32 %v1088, %v1088
      %v1093 = vmul.f32 %v1089, %v1089
      %v1094 = vsub.f32 %v1090, %v1092
      %v1095 = vsub.f32 %v1091, %v1093
      %v1096 = vmax.f32 %v1094, 0.0
      %v1097 = vmax.f32 %v1095, 0.0
      %v1098 = vsub.f32 %v1065, %v1088
      %v1099 = vsub.f32 %v1068, %v1089
      %v1100 = vadd.f32 %v1096, 1e-05
      %v1101 = vadd.f32 %v1097, 1e-05
      %v1102 = vrsqrt.pop %v1100
      %v1103 = vrsqrt.pop %v1101
      %v1104 = vmul.f32 %v1098, %v1102
      %v1105 = vmul.f32 %v1099, %v1103
      %v1107 = vlaneseq
      %v1108 = vshrl.u32 %v1107, 7
      %v1109 = vsub.s32 0, %v1108
      %v1110 = vrot.slane %v1071, %v1109
      %v1112 = vmul.f32 %v1104, %v1110
      %v1113 = vmul.f32 %v1105, %v1110
      %v1115 = vlaneseq
      %v1116 = vshrl.u32 %v1115, 7
      %v1117 = vsub.s32 0, %v1116
      %v1118 = vrot.slane %v1072, %v1117
      %v1120 = vadd.f32 %v1112, %v1118
      %v1121 = vadd.f32 %v1113, %v1118
      %v1122 = vmax.f32 %v1120, 0.0
      %v1123 = vmax.f32 %v1121, 0.0
      %v1124 = vld [vmem:[%s15] sm:$0x1]
      %v1126 = vlaneseq
      %v1127 = vshrl.u32 %v1126, 7
      %v1128 = vsub.s32 0, %v1127
      %v1129 = vrot.slane %v1124, %v1128
      %v1131 = vmul.f32 %v1122, %v1129
      %v1132 = vmul.f32 %v1123, %v1129
      %v1133 = vsel %vm1073, %v1131, 0.0
      %1134 = vadd.xlane.f32.xlu0 %v1133
      %v1135 = vpop.xlane.xlu0 %1134
      %v1136 = vsel %vm1073, %v1132, 0.0
      %1137 = vadd.xlane.f32.xlu0 %v1136
      %v1138 = vpop.xlane.xlu0 %1137
      %v1139 = vld [vmem:[#allocation2] sm:$0x1]
      %v1141 = vlaneseq
      %v1142 = vshrl.u32 %v1141, 7
      %v1143 = vsub.s32 0, %v1142
      %v1144 = vrot.slane %v1139, %v1143
      %v1146 = vadd.f32 %v1135, %v1144
      %v1147 = vadd.f32 %v1138, %v1144
      %vm1148 = vcmask 7168
      %1149 = vst.msk [vmem:[%s574] sm:$0xff] %vm1148, %v1146
      %1150 = vst.msk [vmem:[%s574 + $0x8] sm:$0xff] %vm1148, %v1147
      %s1151 = smul.u32 2, %s30
      %p1152 = scmp.lt.s32.totalorder %s1151, 3
      %s1153 = scalar_select %p1152, %s1151, 3
      %s1154 = smul.addr %s1153, 8
      %s1155 = scalar_lea.vmem %s17, %s1154
      // Predicated region
      $region89: #{tpu_custom_call.1} parent=87 // pred_check
        %p1156 = pneg %p415
      $region90: #{tpu_custom_call.1} parent=87 // pred_check_branch
        %1158 = sbr.rel (%p1156) target = $region92
      $region91: #{tpu_custom_call.1} parent=87 // pred_region
        %s1159 = smul.u32 2, %s30
      $region92: #{tpu_custom_call.1} parent=87 // pred_fallthru
        _
    $region88: #{tpu_custom_call.1} parent=5 // pred_fallthru
      _
    %p1160 = scmp.le.s32.totalorder 2, %s25
    // Predicated region
    $region93: #{tpu_custom_call.1} parent=5 // pred_check
      %p1161 = pneg %p1160
    $region94: #{tpu_custom_call.1} parent=5 // pred_check_branch
      %1163 = sbr.rel (%p1161) target = $region96
    $region95: #{tpu_custom_call.1} parent=5 // pred_region
      %s1164 = ssub.s32 %s25, 2
      // Predicated region
      $region97: #{tpu_custom_call.1} parent=95 // pred_check
        %p1165 = pneg %p421
      $region98: #{tpu_custom_call.1} parent=95 // pred_check_branch
        %1167 = sbr.rel (%p1165) target = $region100
      $region99: #{tpu_custom_call.1} parent=95 // pred_region
        %s1168 = smul.u32 2, %s31
        %p1169 = scmp.lt.s32.totalorder %s1168, 3
        %s1170 = scalar_select %p1169, %s1168, 3
        %s1171 = smul.addr %s1170, 8
        %s1172 = scalar_lea.vmem %s17, %s1171
      $region100: #{tpu_custom_call.1} parent=95 // pred_fallthru
        _
    $region96: #{tpu_custom_call.1} parent=5 // pred_fallthru
      _
  $region6: #{tpu_custom_call.1} parent=0 // loop_footer
    %s29 = sadd.s32 1, %s25
  $region7: #{tpu_custom_call.1} parent=0 // loop_footer_branch
    %24 = sbr.rel target = $region3
  $region8: #{tpu_custom_call.1} parent=0 // loop_exit
    _

</llo_original>
